<compile_context>
chip_gen: v6e
topology: v6e:2x2x1
jax: 0.10.0
libtpu: 0.0.40
codegen_flags: <defaults>
</compile_context>

<pallas_src>
import jax
import jax.numpy as jnp
from jax.experimental import pallas as pl
from jax.experimental.pallas import tpu as pltpu

LANE = 128


def _round_up(x, m):
    return ((x + m - 1) // m) * m


def _gru_encoder_kernel(emb_ref,   # [S, Ep]     bf16  pre-gathered, lane-padded embedded tokens
                        wih_ref,   # [Ep, 3*Hp]  bf16  fused input->hidden weights  [r | z | n]
                        bih_ref,   # [1, 3*Hp]   f32   b_ih with b_hh folded in for the r/z slabs
                        whh_ref,   # [Hp, 3*Hp]  bf16  fused hidden->hidden weights [r | z | n]
                        bhn_ref,   # [1, Hp]     f32   n-gate hidden bias (stays inside r*(...))
                        h0_ref,    # [1, Hp]     f32   initial hidden (lane-padded)
                        out_ref):  # [S, Hp]     f32   all hidden states; row S-1 == h_n
    seq_len = out_ref.shape[0]
    hp = h0_ref.shape[-1]

    # Phase 1: ALL timesteps' input->hidden projections in one well-shaped MXU matmul
    # (bf16 operands, f32 accumulation).  For small S the result lives in vregs
    # ([S, 3Hp] f32) -- no VMEM scratch round-trip.
    xg = (jnp.dot(emb_ref[...], wih_ref[...], preferred_element_type=jnp.float32)
          + bih_ref[...])

    # Hoist the recurrent weights and the n-gate hidden bias out of the serial loop so
    # each step's critical path is only (h @ W_hh) + gate elementwise math.
    whh = whh_ref[...]
    bhn = bhn_ref[...]

    # Phase 2: serial GRU recurrence, statically unrolled (S is known at trace time and
    # small).  TODO(synk): for long sequences, fall back to a fori_loop + VMEM scratch
    # for xg / the output rows to bound vreg live ranges.
    h = h0_ref[...]
    rows = []
    for t in range(seq_len):
        hg = jnp.dot(h.astype(jnp.bfloat16), whh,
                     preferred_element_type=jnp.float32)            # [1, 3*Hp]
        xg_t = xg[t:t + 1, :]
        # PyTorch nn.GRU gate order: r, z, n — each gate owns a 128-lane-aligned slab.
        r = jax.nn.sigmoid(xg_t[:, 0:hp] + hg[:, 0:hp])
        z = jax.nn.sigmoid(xg_t[:, hp:2 * hp] + hg[:, hp:2 * hp])
        n = jnp.tanh(xg_t[:, 2 * hp:] + r * (hg[:, 2 * hp:] + bhn))
        h = n + z * (h - n)                                          # == (1-z)*n + z*h
        rows.append(h)

    # One dense, sublane-packed store instead of S masked single-row stores.
    out_ref[...] = jnp.concatenate(rows, axis=0)


def _fuse_gate_weights(w, in_pad, hp):
    """w: [3, in_dim, H] per-gate (r, z, n) -> [in_pad, 3*hp]; gate g at lanes [g*hp, g*hp+H)."""
    _, in_dim, h = w.shape
    fused = jnp.zeros((in_pad, 3 * hp), jnp.float32)
    for g in range(3):
        fused = fused.at[:in_dim, g * hp:g * hp + h].set(w[g])
    return fused


def _fuse_gate_bias(b, hp):
    """b: [3, 1, H] -> [1, 3*hp]."""
    _, _, h = b.shape
    fused = jnp.zeros((1, 3 * hp), jnp.float32)
    for g in range(3):
        fused = fused.at[:, g * hp:g * hp + h].set(b[g])
    return fused


def pack_encoder_params(params):
    """One-time parameter packing, hoisted out of the per-call forward path."""
    emb_table = params["embedding"]               # [V, E]
    wih, whh = params["w_ih"], params["w_hh"]     # [3, E, H], [3, H, H]
    bih, bhh = params["b_ih"], params["b_hh"]     # [3, 1, H], [3, 1, H]

    V, E = emb_table.shape
    H = whh.shape[-1]
    Ep = _round_up(E, LANE)
    Hp = _round_up(H, LANE)

    # Embedding table: lane-pad and cast to bf16 once; per-call work becomes a single
    # bulk jnp.take gather.
    emb_p = (jnp.zeros((V, Ep), jnp.float32).at[:, :E].set(emb_table)
             .astype(jnp.bfloat16))

    # Fold b_hh for the r and z gates into the input bias (added during phase 1);
    # the n-gate hidden bias must remain inside the r * (W_hn h + b_hn) term.
    bih_f = _fuse_gate_bias(bih, Hp)                                  # [1, 3Hp]
    bhh_f = _fuse_gate_bias(bhh, Hp)                                  # [1, 3Hp]
    bih_fused = bih_f.at[:, :2 * Hp].add(bhh_f[:, :2 * Hp])           # r/z folded
    bhn = bhh_f[:, 2 * Hp:]                                           # [1, Hp]

    return {
        "emb_table": emb_p,                                           # [V, Ep]  bf16
        "w_ih": _fuse_gate_weights(wih, Ep, Hp).astype(jnp.bfloat16), # [Ep, 3Hp] bf16
        "w_hh": _fuse_gate_weights(whh, Hp, Hp).astype(jnp.bfloat16), # [Hp, 3Hp] bf16
        "b_ih_fused": bih_fused,                                      # [1, 3Hp] f32
        "b_hn": bhn,                                                  # [1, Hp]  f32
    }


def encoder_forward(x_ids, hidden, packed):
    """x_ids: int32 [seq_len]; hidden: f32 [1, 1, H].
    Returns (outputs [seq_len, 1, H], hidden [1, 1, H]) — PyTorch Encoder.forward semantics."""
    seq_len = x_ids.shape[0]
    H = hidden.shape[-1]
    Hp = packed["w_hh"].shape[0]

    # Per-call work: one bulk embedding gather + h0 lane pad.
    emb_p = jnp.take(packed["emb_table"], x_ids, axis=0)              # [S, Ep] bf16
    h0_p = jnp.zeros((1, Hp), jnp.float32).at[:, :H].set(hidden.reshape(1, H))

    out_p = pl.pallas_call(
        _gru_encoder_kernel,
        out_shape=jax.ShapeDtypeStruct((seq_len, Hp), jnp.float32),
        in_specs=[pl.BlockSpec(memory_space=pltpu.MemorySpace.VMEM)] * 6,
        out_specs=pl.BlockSpec(memory_space=pltpu.MemorySpace.VMEM),
    )(emb_p, packed["w_ih"], packed["b_ih_fused"], packed["w_hh"],
      packed["b_hn"], h0_p)

    outputs = out_p[:, :H].reshape(seq_len, 1, H)
    h_n = out_p[seq_len - 1, :H].reshape(1, 1, H)   # final hidden == last output row
    return outputs, h_n


def init_params(key, n_words, embedding_size, hidden_size):
    """Deterministic init mirroring nn.Embedding + nn.GRU (unidirectional) shapes.
    Weights stored pre-transposed per gate: [3, in, H] so the math is x @ W."""
    k_emb, k_wih, k_whh, k_bih, k_bhh = jax.random.split(key, 5)
    bound = 1.0 / jnp.sqrt(hidden_size)
    return {
        "embedding": jax.random.normal(k_emb, (n_words, embedding_size), jnp.float32),
        "w_ih": jax.random.uniform(k_wih, (3, embedding_size, hidden_size),
                                   jnp.float32, -bound, bound),
        "w_hh": jax.random.uniform(k_whh, (3, hidden_size, hidden_size),
                                   jnp.float32, -bound, bound),
        "b_ih": jax.random.uniform(k_bih, (3, 1, hidden_size), jnp.float32, -bound, bound),
        "b_hh": jax.random.uniform(k_bhh, (3, 1, hidden_size), jnp.float32, -bound, bound),
    }


def encoder_reference(x_ids, hidden, params):
    """Pure-JAX reference (lax.scan GRU) mirroring the kernel's bf16-operand /
    f32-accumulate matmul numerics."""
    emb = params["embedding"][x_ids]                         # [S, E]
    wih, whh, bih, bhh = (params["w_ih"], params["w_hh"],
                          params["b_ih"], params["b_hh"])
    h0 = hidden.reshape(1, -1)

    def mm(a, b):
        return jnp.dot(a.astype(jnp.bfloat16), b.astype(jnp.bfloat16),
                       preferred_element_type=jnp.float32)

    def step(h, x_t):
        x_t = x_t[None, :]
        r = jax.nn.sigmoid(mm(x_t, wih[0]) + bih[0] + mm(h, whh[0]) + bhh[0])
        z = jax.nn.sigmoid(mm(x_t, wih[1]) + bih[1] + mm(h, whh[1]) + bhh[1])
        n = jnp.tanh(mm(x_t, wih[2]) + bih[2] + r * (mm(h, whh[2]) + bhh[2]))
        h_new = (1.0 - z) * n + z * h
        return h_new, h_new[0]

    h_n, outs = jax.lax.scan(step, h0, emb)
    return outs[:, None, :], h_n[None, :, :]


if __name__ == "__main__":
    n_words, embedding_size, hidden_size, seq_len = 64, 32, 32, 8

    key = jax.random.PRNGKey(0)
    k_params, k_ids = jax.random.split(key)
    params = init_params(k_params, n_words, embedding_size, hidden_size)

    # One-time packing (hoisted out of the forward path, as per the perf review).
    packed = pack_encoder_params(params)

    x_ids = jax.random.randint(k_ids, (seq_len,), 0, n_words, dtype=jnp.int32)
    hidden0 = jnp.zeros((1, 1, hidden_size), jnp.float32)   # Encoder.init_hidden()

    fwd = jax.jit(encoder_forward)
    outputs, h_n = fwd(x_ids, hidden0, packed)
    jax.block_until_ready((outputs, h_n))

    ref_out, ref_h = encoder_reference(x_ids, hidden0, params)
    assert outputs.shape == (seq_len, 1, hidden_size)
    assert h_n.shape == (1, 1, hidden_size)
    # bf16 MXU operands (f32 accumulation) in both paths -> tolerance loosened vs pure-f32.
    assert jnp.allclose(outputs, ref_out, atol=1e-3, rtol=1e-3), \
        float(jnp.max(jnp.abs(outputs - ref_out)))
    assert jnp.allclose(h_n, ref_h, atol=1e-3, rtol=1e-3)

    print("KERNEL_OK")
</pallas_src>

<mosaic_0001>
module attributes {stable_mosaic.version = 11 : i64} {
  func.func @_gru_encoder_kernel(%arg0: memref<8x128xbf16, #tpu.memory_space<vmem>>, %arg1: memref<128x384xbf16, #tpu.memory_space<vmem>>, %arg2: memref<1x384xf32, #tpu.memory_space<vmem>>, %arg3: memref<128x384xbf16, #tpu.memory_space<vmem>>, %arg4: memref<1x128xf32, #tpu.memory_space<vmem>>, %arg5: memref<1x128xf32, #tpu.memory_space<vmem>>, %arg6: memref<8x128xf32, #tpu.memory_space<vmem>>) attributes {dimension_semantics = [], scalar_prefetch = 0 : i64, scratch_operands = 0 : i64, tpu.core_type = #tpu.core_type<tc>} {
    %c0 = arith.constant 0 : index
    %c0_0 = arith.constant 0 : index
    %0 = vector.load %arg0[%c0, %c0_0] : memref<8x128xbf16, #tpu.memory_space<vmem>>, vector<8x128xbf16>
    %c0_1 = arith.constant 0 : index
    %c0_2 = arith.constant 0 : index
    %1 = vector.load %arg1[%c0_1, %c0_2] : memref<128x384xbf16, #tpu.memory_space<vmem>>, vector<128x384xbf16>
    %cst = arith.constant dense<0.000000e+00> : vector<8x384xf32>
    %2 = tpu.matmul %0, %1, %cst {dimension_numbers = #tpu.dot_dimension_numbers<[1], [0], [0], [1], [0, 0, 1, 1], [], []>} : vector<8x128xbf16>, vector<128x384xbf16>, vector<8x384xf32> -> vector<8x384xf32>
    %c0_3 = arith.constant 0 : index
    %c0_4 = arith.constant 0 : index
    %3 = vector.load %arg2[%c0_3, %c0_4] : memref<1x384xf32, #tpu.memory_space<vmem>>, vector<1x384xf32>
    %4 = vector.broadcast %3 : vector<1x384xf32> to vector<8x384xf32>
    %5 = arith.addf %2, %4 : vector<8x384xf32>
    %c0_5 = arith.constant 0 : index
    %c0_6 = arith.constant 0 : index
    %6 = vector.load %arg3[%c0_5, %c0_6] : memref<128x384xbf16, #tpu.memory_space<vmem>>, vector<128x384xbf16>
    %c0_7 = arith.constant 0 : index
    %c0_8 = arith.constant 0 : index
    %7 = vector.load %arg4[%c0_7, %c0_8] : memref<1x128xf32, #tpu.memory_space<vmem>>, vector<1x128xf32>
    %c0_9 = arith.constant 0 : index
    %c0_10 = arith.constant 0 : index
    %8 = vector.load %arg5[%c0_9, %c0_10] : memref<1x128xf32, #tpu.memory_space<vmem>>, vector<1x128xf32>
    %9 = arith.truncf %8 : vector<1x128xf32> to vector<1x128xbf16>
    %cst_11 = arith.constant dense<0.000000e+00> : vector<1x384xf32>
    %10 = tpu.matmul %9, %6, %cst_11 {dimension_numbers = #tpu.dot_dimension_numbers<[1], [0], [0], [1], [0, 0, 1, 1], [], []>} : vector<1x128xbf16>, vector<128x384xbf16>, vector<1x384xf32> -> vector<1x384xf32>
    %11 = vector.extract_strided_slice %5 {offsets = [0, 0], sizes = [1, 384], strides = [1, 1]} : vector<8x384xf32> to vector<1x384xf32>
    %12 = vector.extract_strided_slice %11 {offsets = [0, 0], sizes = [1, 128], strides = [1, 1]} : vector<1x384xf32> to vector<1x128xf32>
    %13 = vector.extract_strided_slice %10 {offsets = [0, 0], sizes = [1, 128], strides = [1, 1]} : vector<1x384xf32> to vector<1x128xf32>
    %14 = arith.addf %12, %13 : vector<1x128xf32>
    %15 = arith.negf %14 : vector<1x128xf32>
    %16 = math.exp %15 : vector<1x128xf32>
    %cst_12 = arith.constant 1.000000e+00 : f32
    %17 = vector.broadcast %cst_12 : f32 to vector<1x128xf32>
    %18 = arith.addf %17, %16 : vector<1x128xf32>
    %19 = arith.divf %17, %18 : vector<1x128xf32>
    %20 = vector.extract_strided_slice %11 {offsets = [0, 128], sizes = [1, 128], strides = [1, 1]} : vector<1x384xf32> to vector<1x128xf32>
    %21 = vector.extract_strided_slice %10 {offsets = [0, 128], sizes = [1, 128], strides = [1, 1]} : vector<1x384xf32> to vector<1x128xf32>
    %22 = arith.addf %20, %21 : vector<1x128xf32>
    %23 = arith.negf %22 : vector<1x128xf32>
    %24 = math.exp %23 : vector<1x128xf32>
    %cst_13 = arith.constant 1.000000e+00 : f32
    %25 = vector.broadcast %cst_13 : f32 to vector<1x128xf32>
    %26 = arith.addf %25, %24 : vector<1x128xf32>
    %27 = arith.divf %25, %26 : vector<1x128xf32>
    %28 = vector.extract_strided_slice %11 {offsets = [0, 256], sizes = [1, 128], strides = [1, 1]} : vector<1x384xf32> to vector<1x128xf32>
    %29 = vector.extract_strided_slice %10 {offsets = [0, 256], sizes = [1, 128], strides = [1, 1]} : vector<1x384xf32> to vector<1x128xf32>
    %30 = arith.addf %29, %7 : vector<1x128xf32>
    %31 = arith.mulf %19, %30 : vector<1x128xf32>
    %32 = arith.addf %28, %31 : vector<1x128xf32>
    %33 = math.tanh %32 : vector<1x128xf32>
    %34 = arith.subf %8, %33 : vector<1x128xf32>
    %35 = arith.mulf %27, %34 : vector<1x128xf32>
    %36 = arith.addf %33, %35 : vector<1x128xf32>
    %37 = arith.truncf %36 : vector<1x128xf32> to vector<1x128xbf16>
    %cst_14 = arith.constant dense<0.000000e+00> : vector<1x384xf32>
    %38 = tpu.matmul %37, %6, %cst_14 {dimension_numbers = #tpu.dot_dimension_numbers<[1], [0], [0], [1], [0, 0, 1, 1], [], []>} : vector<1x128xbf16>, vector<128x384xbf16>, vector<1x384xf32> -> vector<1x384xf32>
    %39 = vector.extract_strided_slice %5 {offsets = [1, 0], sizes = [1, 384], strides = [1, 1]} : vector<8x384xf32> to vector<1x384xf32>
    %40 = vector.extract_strided_slice %39 {offsets = [0, 0], sizes = [1, 128], strides = [1, 1]} : vector<1x384xf32> to vector<1x128xf32>
    %41 = vector.extract_strided_slice %38 {offsets = [0, 0], sizes = [1, 128], strides = [1, 1]} : vector<1x384xf32> to vector<1x128xf32>
    %42 = arith.addf %40, %41 : vector<1x128xf32>
    %43 = arith.negf %42 : vector<1x128xf32>
    %44 = math.exp %43 : vector<1x128xf32>
    %cst_15 = arith.constant 1.000000e+00 : f32
    %45 = vector.broadcast %cst_15 : f32 to vector<1x128xf32>
    %46 = arith.addf %45, %44 : vector<1x128xf32>
    %47 = arith.divf %45, %46 : vector<1x128xf32>
    %48 = vector.extract_strided_slice %39 {offsets = [0, 128], sizes = [1, 128], strides = [1, 1]} : vector<1x384xf32> to vector<1x128xf32>
    %49 = vector.extract_strided_slice %38 {offsets = [0, 128], sizes = [1, 128], strides = [1, 1]} : vector<1x384xf32> to vector<1x128xf32>
    %50 = arith.addf %48, %49 : vector<1x128xf32>
    %51 = arith.negf %50 : vector<1x128xf32>
    %52 = math.exp %51 : vector<1x128xf32>
    %cst_16 = arith.constant 1.000000e+00 : f32
    %53 = vector.broadcast %cst_16 : f32 to vector<1x128xf32>
    %54 = arith.addf %53, %52 : vector<1x128xf32>
    %55 = arith.divf %53, %54 : vector<1x128xf32>
    %56 = vector.extract_strided_slice %39 {offsets = [0, 256], sizes = [1, 128], strides = [1, 1]} : vector<1x384xf32> to vector<1x128xf32>
    %57 = vector.extract_strided_slice %38 {offsets = [0, 256], sizes = [1, 128], strides = [1, 1]} : vector<1x384xf32> to vector<1x128xf32>
    %58 = arith.addf %57, %7 : vector<1x128xf32>
    %59 = arith.mulf %47, %58 : vector<1x128xf32>
    %60 = arith.addf %56, %59 : vector<1x128xf32>
    %61 = math.tanh %60 : vector<1x128xf32>
    %62 = arith.subf %36, %61 : vector<1x128xf32>
    %63 = arith.mulf %55, %62 : vector<1x128xf32>
    %64 = arith.addf %61, %63 : vector<1x128xf32>
    %65 = arith.truncf %64 : vector<1x128xf32> to vector<1x128xbf16>
    %cst_17 = arith.constant dense<0.000000e+00> : vector<1x384xf32>
    %66 = tpu.matmul %65, %6, %cst_17 {dimension_numbers = #tpu.dot_dimension_numbers<[1], [0], [0], [1], [0, 0, 1, 1], [], []>} : vector<1x128xbf16>, vector<128x384xbf16>, vector<1x384xf32> -> vector<1x384xf32>
    %67 = vector.extract_strided_slice %5 {offsets = [2, 0], sizes = [1, 384], strides = [1, 1]} : vector<8x384xf32> to vector<1x384xf32>
    %68 = vector.extract_strided_slice %67 {offsets = [0, 0], sizes = [1, 128], strides = [1, 1]} : vector<1x384xf32> to vector<1x128xf32>
    %69 = vector.extract_strided_slice %66 {offsets = [0, 0], sizes = [1, 128], strides = [1, 1]} : vector<1x384xf32> to vector<1x128xf32>
    %70 = arith.addf %68, %69 : vector<1x128xf32>
    %71 = arith.negf %70 : vector<1x128xf32>
    %72 = math.exp %71 : vector<1x128xf32>
    %cst_18 = arith.constant 1.000000e+00 : f32
    %73 = vector.broadcast %cst_18 : f32 to vector<1x128xf32>
    %74 = arith.addf %73, %72 : vector<1x128xf32>
    %75 = arith.divf %73, %74 : vector<1x128xf32>
    %76 = vector.extract_strided_slice %67 {offsets = [0, 128], sizes = [1, 128], strides = [1, 1]} : vector<1x384xf32> to vector<1x128xf32>
    %77 = vector.extract_strided_slice %66 {offsets = [0, 128], sizes = [1, 128], strides = [1, 1]} : vector<1x384xf32> to vector<1x128xf32>
    %78 = arith.addf %76, %77 : vector<1x128xf32>
    %79 = arith.negf %78 : vector<1x128xf32>
    %80 = math.exp %79 : vector<1x128xf32>
    %cst_19 = arith.constant 1.000000e+00 : f32
    %81 = vector.broadcast %cst_19 : f32 to vector<1x128xf32>
    %82 = arith.addf %81, %80 : vector<1x128xf32>
    %83 = arith.divf %81, %82 : vector<1x128xf32>
    %84 = vector.extract_strided_slice %67 {offsets = [0, 256], sizes = [1, 128], strides = [1, 1]} : vector<1x384xf32> to vector<1x128xf32>
    %85 = vector.extract_strided_slice %66 {offsets = [0, 256], sizes = [1, 128], strides = [1, 1]} : vector<1x384xf32> to vector<1x128xf32>
    %86 = arith.addf %85, %7 : vector<1x128xf32>
    %87 = arith.mulf %75, %86 : vector<1x128xf32>
    %88 = arith.addf %84, %87 : vector<1x128xf32>
    %89 = math.tanh %88 : vector<1x128xf32>
    %90 = arith.subf %64, %89 : vector<1x128xf32>
    %91 = arith.mulf %83, %90 : vector<1x128xf32>
    %92 = arith.addf %89, %91 : vector<1x128xf32>
    %93 = arith.truncf %92 : vector<1x128xf32> to vector<1x128xbf16>
    %cst_20 = arith.constant dense<0.000000e+00> : vector<1x384xf32>
    %94 = tpu.matmul %93, %6, %cst_20 {dimension_numbers = #tpu.dot_dimension_numbers<[1], [0], [0], [1], [0, 0, 1, 1], [], []>} : vector<1x128xbf16>, vector<128x384xbf16>, vector<1x384xf32> -> vector<1x384xf32>
    %95 = vector.extract_strided_slice %5 {offsets = [3, 0], sizes = [1, 384], strides = [1, 1]} : vector<8x384xf32> to vector<1x384xf32>
    %96 = vector.extract_strided_slice %95 {offsets = [0, 0], sizes = [1, 128], strides = [1, 1]} : vector<1x384xf32> to vector<1x128xf32>
    %97 = vector.extract_strided_slice %94 {offsets = [0, 0], sizes = [1, 128], strides = [1, 1]} : vector<1x384xf32> to vector<1x128xf32>
    %98 = arith.addf %96, %97 : vector<1x128xf32>
    %99 = arith.negf %98 : vector<1x128xf32>
    %100 = math.exp %99 : vector<1x128xf32>
    %cst_21 = arith.constant 1.000000e+00 : f32
    %101 = vector.broadcast %cst_21 : f32 to vector<1x128xf32>
    %102 = arith.addf %101, %100 : vector<1x128xf32>
    %103 = arith.divf %101, %102 : vector<1x128xf32>
    %104 = vector.extract_strided_slice %95 {offsets = [0, 128], sizes = [1, 128], strides = [1, 1]} : vector<1x384xf32> to vector<1x128xf32>
    %105 = vector.extract_strided_slice %94 {offsets = [0, 128], sizes = [1, 128], strides = [1, 1]} : vector<1x384xf32> to vector<1x128xf32>
    %106 = arith.addf %104, %105 : vector<1x128xf32>
    %107 = arith.negf %106 : vector<1x128xf32>
    %108 = math.exp %107 : vector<1x128xf32>
    %cst_22 = arith.constant 1.000000e+00 : f32
    %109 = vector.broadcast %cst_22 : f32 to vector<1x128xf32>
    %110 = arith.addf %109, %108 : vector<1x128xf32>
    %111 = arith.divf %109, %110 : vector<1x128xf32>
    %112 = vector.extract_strided_slice %95 {offsets = [0, 256], sizes = [1, 128], strides = [1, 1]} : vector<1x384xf32> to vector<1x128xf32>
    %113 = vector.extract_strided_slice %94 {offsets = [0, 256], sizes = [1, 128], strides = [1, 1]} : vector<1x384xf32> to vector<1x128xf32>
    %114 = arith.addf %113, %7 : vector<1x128xf32>
    %115 = arith.mulf %103, %114 : vector<1x128xf32>
    %116 = arith.addf %112, %115 : vector<1x128xf32>
    %117 = math.tanh %116 : vector<1x128xf32>
    %118 = arith.subf %92, %117 : vector<1x128xf32>
    %119 = arith.mulf %111, %118 : vector<1x128xf32>
    %120 = arith.addf %117, %119 : vector<1x128xf32>
    %121 = arith.truncf %120 : vector<1x128xf32> to vector<1x128xbf16>
    %cst_23 = arith.constant dense<0.000000e+00> : vector<1x384xf32>
    %122 = tpu.matmul %121, %6, %cst_23 {dimension_numbers = #tpu.dot_dimension_numbers<[1], [0], [0], [1], [0, 0, 1, 1], [], []>} : vector<1x128xbf16>, vector<128x384xbf16>, vector<1x384xf32> -> vector<1x384xf32>
    %123 = vector.extract_strided_slice %5 {offsets = [4, 0], sizes = [1, 384], strides = [1, 1]} : vector<8x384xf32> to vector<1x384xf32>
    %124 = vector.extract_strided_slice %123 {offsets = [0, 0], sizes = [1, 128], strides = [1, 1]} : vector<1x384xf32> to vector<1x128xf32>
    %125 = vector.extract_strided_slice %122 {offsets = [0, 0], sizes = [1, 128], strides = [1, 1]} : vector<1x384xf32> to vector<1x128xf32>
    %126 = arith.addf %124, %125 : vector<1x128xf32>
    %127 = arith.negf %126 : vector<1x128xf32>
    %128 = math.exp %127 : vector<1x128xf32>
    %cst_24 = arith.constant 1.000000e+00 : f32
    %129 = vector.broadcast %cst_24 : f32 to vector<1x128xf32>
    %130 = arith.addf %129, %128 : vector<1x128xf32>
    %131 = arith.divf %129, %130 : vector<1x128xf32>
    %132 = vector.extract_strided_slice %123 {offsets = [0, 128], sizes = [1, 128], strides = [1, 1]} : vector<1x384xf32> to vector<1x128xf32>
    %133 = vector.extract_strided_slice %122 {offsets = [0, 128], sizes = [1, 128], strides = [1, 1]} : vector<1x384xf32> to vector<1x128xf32>
    %134 = arith.addf %132, %133 : vector<1x128xf32>
    %135 = arith.negf %134 : vector<1x128xf32>
    %136 = math.exp %135 : vector<1x128xf32>
    %cst_25 = arith.constant 1.000000e+00 : f32
    %137 = vector.broadcast %cst_25 : f32 to vector<1x128xf32>
    %138 = arith.addf %137, %136 : vector<1x128xf32>
    %139 = arith.divf %137, %138 : vector<1x128xf32>
    %140 = vector.extract_strided_slice %123 {offsets = [0, 256], sizes = [1, 128], strides = [1, 1]} : vector<1x384xf32> to vector<1x128xf32>
    %141 = vector.extract_strided_slice %122 {offsets = [0, 256], sizes = [1, 128], strides = [1, 1]} : vector<1x384xf32> to vector<1x128xf32>
    %142 = arith.addf %141, %7 : vector<1x128xf32>
    %143 = arith.mulf %131, %142 : vector<1x128xf32>
    %144 = arith.addf %140, %143 : vector<1x128xf32>
    %145 = math.tanh %144 : vector<1x128xf32>
    %146 = arith.subf %120, %145 : vector<1x128xf32>
    %147 = arith.mulf %139, %146 : vector<1x128xf32>
    %148 = arith.addf %145, %147 : vector<1x128xf32>
    %149 = arith.truncf %148 : vector<1x128xf32> to vector<1x128xbf16>
    %cst_26 = arith.constant dense<0.000000e+00> : vector<1x384xf32>
    %150 = tpu.matmul %149, %6, %cst_26 {dimension_numbers = #tpu.dot_dimension_numbers<[1], [0], [0], [1], [0, 0, 1, 1], [], []>} : vector<1x128xbf16>, vector<128x384xbf16>, vector<1x384xf32> -> vector<1x384xf32>
    %151 = vector.extract_strided_slice %5 {offsets = [5, 0], sizes = [1, 384], strides = [1, 1]} : vector<8x384xf32> to vector<1x384xf32>
    %152 = vector.extract_strided_slice %151 {offsets = [0, 0], sizes = [1, 128], strides = [1, 1]} : vector<1x384xf32> to vector<1x128xf32>
    %153 = vector.extract_strided_slice %150 {offsets = [0, 0], sizes = [1, 128], strides = [1, 1]} : vector<1x384xf32> to vector<1x128xf32>
    %154 = arith.addf %152, %153 : vector<1x128xf32>
    %155 = arith.negf %154 : vector<1x128xf32>
    %156 = math.exp %155 : vector<1x128xf32>
    %cst_27 = arith.constant 1.000000e+00 : f32
    %157 = vector.broadcast %cst_27 : f32 to vector<1x128xf32>
    %158 = arith.addf %157, %156 : vector<1x128xf32>
    %159 = arith.divf %157, %158 : vector<1x128xf32>
    %160 = vector.extract_strided_slice %151 {offsets = [0, 128], sizes = [1, 128], strides = [1, 1]} : vector<1x384xf32> to vector<1x128xf32>
    %161 = vector.extract_strided_slice %150 {offsets = [0, 128], sizes = [1, 128], strides = [1, 1]} : vector<1x384xf32> to vector<1x128xf32>
    %162 = arith.addf %160, %161 : vector<1x128xf32>
    %163 = arith.negf %162 : vector<1x128xf32>
    %164 = math.exp %163 : vector<1x128xf32>
    %cst_28 = arith.constant 1.000000e+00 : f32
    %165 = vector.broadcast %cst_28 : f32 to vector<1x128xf32>
    %166 = arith.addf %165, %164 : vector<1x128xf32>
    %167 = arith.divf %165, %166 : vector<1x128xf32>
    %168 = vector.extract_strided_slice %151 {offsets = [0, 256], sizes = [1, 128], strides = [1, 1]} : vector<1x384xf32> to vector<1x128xf32>
    %169 = vector.extract_strided_slice %150 {offsets = [0, 256], sizes = [1, 128], strides = [1, 1]} : vector<1x384xf32> to vector<1x128xf32>
    %170 = arith.addf %169, %7 : vector<1x128xf32>
    %171 = arith.mulf %159, %170 : vector<1x128xf32>
    %172 = arith.addf %168, %171 : vector<1x128xf32>
    %173 = math.tanh %172 : vector<1x128xf32>
    %174 = arith.subf %148, %173 : vector<1x128xf32>
    %175 = arith.mulf %167, %174 : vector<1x128xf32>
    %176 = arith.addf %173, %175 : vector<1x128xf32>
    %177 = arith.truncf %176 : vector<1x128xf32> to vector<1x128xbf16>
    %cst_29 = arith.constant dense<0.000000e+00> : vector<1x384xf32>
    %178 = tpu.matmul %177, %6, %cst_29 {dimension_numbers = #tpu.dot_dimension_numbers<[1], [0], [0], [1], [0, 0, 1, 1], [], []>} : vector<1x128xbf16>, vector<128x384xbf16>, vector<1x384xf32> -> vector<1x384xf32>
    %179 = vector.extract_strided_slice %5 {offsets = [6, 0], sizes = [1, 384], strides = [1, 1]} : vector<8x384xf32> to vector<1x384xf32>
    %180 = vector.extract_strided_slice %179 {offsets = [0, 0], sizes = [1, 128], strides = [1, 1]} : vector<1x384xf32> to vector<1x128xf32>
    %181 = vector.extract_strided_slice %178 {offsets = [0, 0], sizes = [1, 128], strides = [1, 1]} : vector<1x384xf32> to vector<1x128xf32>
    %182 = arith.addf %180, %181 : vector<1x128xf32>
    %183 = arith.negf %182 : vector<1x128xf32>
    %184 = math.exp %183 : vector<1x128xf32>
    %cst_30 = arith.constant 1.000000e+00 : f32
    %185 = vector.broadcast %cst_30 : f32 to vector<1x128xf32>
    %186 = arith.addf %185, %184 : vector<1x128xf32>
    %187 = arith.divf %185, %186 : vector<1x128xf32>
    %188 = vector.extract_strided_slice %179 {offsets = [0, 128], sizes = [1, 128], strides = [1, 1]} : vector<1x384xf32> to vector<1x128xf32>
    %189 = vector.extract_strided_slice %178 {offsets = [0, 128], sizes = [1, 128], strides = [1, 1]} : vector<1x384xf32> to vector<1x128xf32>
    %190 = arith.addf %188, %189 : vector<1x128xf32>
    %191 = arith.negf %190 : vector<1x128xf32>
    %192 = math.exp %191 : vector<1x128xf32>
    %cst_31 = arith.constant 1.000000e+00 : f32
    %193 = vector.broadcast %cst_31 : f32 to vector<1x128xf32>
    %194 = arith.addf %193, %192 : vector<1x128xf32>
    %195 = arith.divf %193, %194 : vector<1x128xf32>
    %196 = vector.extract_strided_slice %179 {offsets = [0, 256], sizes = [1, 128], strides = [1, 1]} : vector<1x384xf32> to vector<1x128xf32>
    %197 = vector.extract_strided_slice %178 {offsets = [0, 256], sizes = [1, 128], strides = [1, 1]} : vector<1x384xf32> to vector<1x128xf32>
    %198 = arith.addf %197, %7 : vector<1x128xf32>
    %199 = arith.mulf %187, %198 : vector<1x128xf32>
    %200 = arith.addf %196, %199 : vector<1x128xf32>
    %201 = math.tanh %200 : vector<1x128xf32>
    %202 = arith.subf %176, %201 : vector<1x128xf32>
    %203 = arith.mulf %195, %202 : vector<1x128xf32>
    %204 = arith.addf %201, %203 : vector<1x128xf32>
    %205 = arith.truncf %204 : vector<1x128xf32> to vector<1x128xbf16>
    %cst_32 = arith.constant dense<0.000000e+00> : vector<1x384xf32>
    %206 = tpu.matmul %205, %6, %cst_32 {dimension_numbers = #tpu.dot_dimension_numbers<[1], [0], [0], [1], [0, 0, 1, 1], [], []>} : vector<1x128xbf16>, vector<128x384xbf16>, vector<1x384xf32> -> vector<1x384xf32>
    %207 = vector.extract_strided_slice %5 {offsets = [7, 0], sizes = [1, 384], strides = [1, 1]} : vector<8x384xf32> to vector<1x384xf32>
    %208 = vector.extract_strided_slice %207 {offsets = [0, 0], sizes = [1, 128], strides = [1, 1]} : vector<1x384xf32> to vector<1x128xf32>
    %209 = vector.extract_strided_slice %206 {offsets = [0, 0], sizes = [1, 128], strides = [1, 1]} : vector<1x384xf32> to vector<1x128xf32>
    %210 = arith.addf %208, %209 : vector<1x128xf32>
    %211 = arith.negf %210 : vector<1x128xf32>
    %212 = math.exp %211 : vector<1x128xf32>
    %cst_33 = arith.constant 1.000000e+00 : f32
    %213 = vector.broadcast %cst_33 : f32 to vector<1x128xf32>
    %214 = arith.addf %213, %212 : vector<1x128xf32>
    %215 = arith.divf %213, %214 : vector<1x128xf32>
    %216 = vector.extract_strided_slice %207 {offsets = [0, 128], sizes = [1, 128], strides = [1, 1]} : vector<1x384xf32> to vector<1x128xf32>
    %217 = vector.extract_strided_slice %206 {offsets = [0, 128], sizes = [1, 128], strides = [1, 1]} : vector<1x384xf32> to vector<1x128xf32>
    %218 = arith.addf %216, %217 : vector<1x128xf32>
    %219 = arith.negf %218 : vector<1x128xf32>
    %220 = math.exp %219 : vector<1x128xf32>
    %cst_34 = arith.constant 1.000000e+00 : f32
    %221 = vector.broadcast %cst_34 : f32 to vector<1x128xf32>
    %222 = arith.addf %221, %220 : vector<1x128xf32>
    %223 = arith.divf %221, %222 : vector<1x128xf32>
    %224 = vector.extract_strided_slice %207 {offsets = [0, 256], sizes = [1, 128], strides = [1, 1]} : vector<1x384xf32> to vector<1x128xf32>
    %225 = vector.extract_strided_slice %206 {offsets = [0, 256], sizes = [1, 128], strides = [1, 1]} : vector<1x384xf32> to vector<1x128xf32>
    %226 = arith.addf %225, %7 : vector<1x128xf32>
    %227 = arith.mulf %215, %226 : vector<1x128xf32>
    %228 = arith.addf %224, %227 : vector<1x128xf32>
    %229 = math.tanh %228 : vector<1x128xf32>
    %230 = arith.subf %204, %229 : vector<1x128xf32>
    %231 = arith.mulf %223, %230 : vector<1x128xf32>
    %232 = arith.addf %229, %231 : vector<1x128xf32>
    %233 = tpu.concatenate %36, %64, %92, %120, %148, %176, %204, %232 in 0 : vector<1x128xf32>, vector<1x128xf32>, vector<1x128xf32>, vector<1x128xf32>, vector<1x128xf32>, vector<1x128xf32>, vector<1x128xf32>, vector<1x128xf32> -> vector<8x128xf32>
    %c0_35 = arith.constant 0 : index
    %c0_36 = arith.constant 0 : index
    %234 = vector.load %arg6[%c0_35, %c0_36] : memref<8x128xf32, #tpu.memory_space<vmem>>, vector<8x128xf32>
    tpu.vector_store %arg6[%c0_35, %c0_36], %233 {strides = array<i32>} : memref<8x128xf32, #tpu.memory_space<vmem>>, vector<8x128xf32>,
    return
  }
}

</mosaic_0001>

<llo_original>
// kernel: encoder_forward.1
$region0: #{encoder_forward.1}
  #allocation0 [shape = 'u32[]', space=smem, size = 0x4, offset = 0x4, fixed_abs, tag = 'smem constant byte address 0x4 - core index']
  #allocation1 [shape = 'u32[144,128]{1,0:T(1,128)}', space=vmem, size = 0x12000, scoped, tag = 'internal scratch']
  %s0 = inlined_call_operand.vmem [shape: bf16[8,128], index: 0, kind: input, shape index: {}]
  %s1 = inlined_call_operand.hbm [shape: bf16[128,384], index: 1, kind: input, shape index: {}]
  %s2 = inlined_call_operand.vmem [shape: f32[1,384], index: 2, kind: input, shape index: {}]
  %s3 = inlined_call_operand.hbm [shape: bf16[128,384], index: 3, kind: input, shape index: {}]
  %s4 = inlined_call_operand.vmem [shape: f32[1,128], index: 4, kind: input, shape index: {}]
  %s5 = inlined_call_operand.vmem [shape: f32[1,128], index: 5, kind: input, shape index: {}]
  %s6 = inlined_call_operand.vmem [shape: f32[8,128], index: 6, kind: output, shape index: {}]
  %s7 = sld [smem:[#allocation0]]
  $region42: #{encoder_forward.1} parent=0
    _
  %s9 = ssub.s32 1, %s7
  %s10 = scalar_select 0, %s9, %s7
  $region1: #{encoder_forward.1} parent=0
    #allocation2 [shape = 'u8[98304]{0}', space=vmem, size = 0x18000, scoped, tag = 'input window, operand 1, single buffered']
    #allocation3 [shape = 's32[1]{0}', space=sflag, size = 0x4, scoped, tag = 'scoped memory for encoder_forward.1']
    #allocation4 [shape = 'u8[98304]{0}', space=vmem, size = 0x18000, scoped, tag = 'input window, operand 3, single buffered']
    #allocation5 [shape = 's32[1]{0}', space=sflag, size = 0x4, scoped, tag = 'scoped memory for encoder_forward.1']
    %11 = vsyncpa [#allocation3], 0
    %12 = vsyncpa [#allocation5], 0
    // Predicated region
    $region2: #{encoder_forward.1} parent=1 // pred_check
      _
    $region3: #{encoder_forward.1} parent=1 // pred_check_branch
      %14 = sbr.rel (0) target = $region5
    $region4: #{encoder_forward.1} parent=1 // pred_region
      _
    $region5: #{encoder_forward.1} parent=1 // pred_fallthru
      _
    // Predicated region
    $region6: #{encoder_forward.1} parent=1 // pred_check
      _
    $region7: #{encoder_forward.1} parent=1 // pred_check_branch
      %16 = sbr.rel (0) target = $region9
    $region8: #{encoder_forward.1} parent=1 // pred_region
      %s18 = ssub.s32 3072, 3072
      %19 = vsyncadd [#allocation3], %s18
      %s20 = sshll.u32 [#allocation2], 4
      %s21 = int_to_ptr.vmem [resolvable:$true] %s20
      %26 = dma.hbm_to_vmem [thread:$0]  %s1, 3072, %s21, [#allocation3], 192, 192, 12
    $region9: #{encoder_forward.1} parent=1 // pred_fallthru
      _
    // Predicated region
    $region10: #{encoder_forward.1} parent=1 // pred_check
      _
    $region11: #{encoder_forward.1} parent=1 // pred_check_branch
      %28 = sbr.rel (0) target = $region13
    $region12: #{encoder_forward.1} parent=1 // pred_region
      _
    $region13: #{encoder_forward.1} parent=1 // pred_fallthru
      _
    // Predicated region
    $region14: #{encoder_forward.1} parent=1 // pred_check
      _
    $region15: #{encoder_forward.1} parent=1 // pred_check_branch
      %30 = sbr.rel (0) target = $region17
    $region16: #{encoder_forward.1} parent=1 // pred_region
      %s32 = ssub.s32 3072, 3072
      %33 = vsyncadd [#allocation5], %s32
      %s34 = sshll.u32 [#allocation4], 4
      %s35 = int_to_ptr.vmem [resolvable:$true] %s34
      %40 = dma.hbm_to_vmem [thread:$0]  %s3, 3072, %s35, [#allocation5], 192, 192, 12
    $region17: #{encoder_forward.1} parent=1 // pred_fallthru
      _
    // Predicated region
    $region18: #{encoder_forward.1} parent=1 // pred_check
      _
    $region19: #{encoder_forward.1} parent=1 // pred_check_branch
      %42 = sbr.rel (0) target = $region21
    $region20: #{encoder_forward.1} parent=1 // pred_region
      _
    $region21: #{encoder_forward.1} parent=1 // pred_fallthru
      _
    // Predicated region
    $region22: #{encoder_forward.1} parent=1 // pred_check
      _
    $region23: #{encoder_forward.1} parent=1 // pred_check_branch
      %44 = sbr.rel (0) target = $region25
    $region24: #{encoder_forward.1} parent=1 // pred_region
      _
    $region25: #{encoder_forward.1} parent=1 // pred_fallthru
      _
    // Predicated region
    $region26: #{encoder_forward.1} parent=1 // pred_check
      _
    $region27: #{encoder_forward.1} parent=1 // pred_check_branch
      %46 = sbr.rel (0) target = $region29
    $region28: #{encoder_forward.1} parent=1 // pred_region
      %47 = dma.done [#allocation3], 3072
    $region29: #{encoder_forward.1} parent=1 // pred_fallthru
      _
    // Predicated region
    $region30: #{encoder_forward.1} parent=1 // pred_check
      _
    $region31: #{encoder_forward.1} parent=1 // pred_check_branch
      %49 = sbr.rel (0) target = $region33
    $region32: #{encoder_forward.1} parent=1 // pred_region
      %50 = dma.done [#allocation5], 3072
    $region33: #{encoder_forward.1} parent=1 // pred_fallthru
      _
    %v52 = vld [vmem:[%s0] sm:$0xf]
    %v53 = vld [vmem:[#allocation2] sm:$0xff]
    %v54 = vld [vmem:[#allocation2 + $0x8] sm:$0xf]
    %v55 = vld [vmem:[#allocation2 + $0xc] sm:$0xff]
    %v56 = vld [vmem:[#allocation2 + $0x14] sm:$0xf]
    %v57 = vld [vmem:[#allocation2 + $0x18] sm:$0xff]
    %v58 = vld [vmem:[#allocation2 + $0x20] sm:$0xf]
    %v59 = vld [vmem:[#allocation2 + $0x24] sm:$0xff]
    %v60 = vld [vmem:[#allocation2 + $0x2c] sm:$0xf]
    %v61 = vld [vmem:[#allocation2 + $0x30] sm:$0xff]
    %v62 = vld [vmem:[#allocation2 + $0x38] sm:$0xf]
    %v63 = vld [vmem:[#allocation2 + $0x3c] sm:$0xff]
    %v64 = vld [vmem:[#allocation2 + $0x44] sm:$0xf]
    %v65 = vld [vmem:[#allocation2 + $0x48] sm:$0xff]
    %v66 = vld [vmem:[#allocation2 + $0x50] sm:$0xf]
    %v67 = vld [vmem:[#allocation2 + $0x54] sm:$0xff]
    %v68 = vld [vmem:[#allocation2 + $0x5c] sm:$0xf]
    %v69 = vld [vmem:[#allocation2 + $0x60] sm:$0xff]
    %v70 = vld [vmem:[#allocation2 + $0x68] sm:$0xf]
    %v71 = vld [vmem:[#allocation2 + $0x6c] sm:$0xff]
    %v72 = vld [vmem:[#allocation2 + $0x74] sm:$0xf]
    %v73 = vld [vmem:[#allocation2 + $0x78] sm:$0xff]
    %v74 = vld [vmem:[#allocation2 + $0x80] sm:$0xf]
    %v75 = vld [vmem:[#allocation2 + $0x84] sm:$0xff]
    %v76 = vld [vmem:[#allocation2 + $0x8c] sm:$0xf]
    %v77 = vld [vmem:[#allocation2 + $0x90] sm:$0xff]
    %v78 = vld [vmem:[#allocation2 + $0x98] sm:$0xf]
    %v79 = vld [vmem:[#allocation2 + $0x9c] sm:$0xff]
    %v80 = vld [vmem:[#allocation2 + $0xa4] sm:$0xf]
    %v81 = vld [vmem:[#allocation2 + $0xa8] sm:$0xff]
    %v82 = vld [vmem:[#allocation2 + $0xb0] sm:$0xf]
    %v83 = vld [vmem:[#allocation2 + $0xb4] sm:$0xff]
    %v84 = vld [vmem:[#allocation2 + $0xbc] sm:$0xf]
    %v85 = vld [vmem:[%s2] sm:$0x7]
    %v87 = vlaneseq
    %v88 = vshrl.u32 %v87, 7
    %v89 = vsub.s32 0, %v88
    %v90 = vrot.slane %v85, %v89
    %v91 = vlaneseq
    %v92 = vshrl.u32 %v91, 7
    %v93 = vsub.s32 1, %v92
    %v94 = vrot.slane %v85, %v93
    %v95 = vlaneseq
    %v96 = vshrl.u32 %v95, 7
    %v97 = vsub.s32 2, %v96
    %v98 = vrot.slane %v85, %v97
    %v134 = vunpack.c.l.b16 %v53
    %v135 = vunpack.c.h.b16 %v53
    %v136 = vunpack.c.l.b16 %v54
    %v137 = vunpack.c.l.b16 %v55
    %v138 = vunpack.c.h.b16 %v55
    %v139 = vunpack.c.l.b16 %v56
    %v140 = vunpack.c.l.b16 %v57
    %v141 = vunpack.c.h.b16 %v57
    %v142 = vunpack.c.l.b16 %v58
    %v143 = vunpack.c.l.b16 %v59
    %v144 = vunpack.c.h.b16 %v59
    %v145 = vunpack.c.l.b16 %v60
    %v146 = vunpack.c.l.b16 %v61
    %v147 = vunpack.c.h.b16 %v61
    %v148 = vunpack.c.l.b16 %v62
    %v149 = vunpack.c.l.b16 %v63
    %v150 = vunpack.c.h.b16 %v63
    %v151 = vunpack.c.l.b16 %v64
    %v152 = vunpack.c.l.b16 %v65
    %v153 = vunpack.c.h.b16 %v65
    %v154 = vunpack.c.l.b16 %v66
    %v155 = vunpack.c.l.b16 %v67
    %v156 = vunpack.c.h.b16 %v67
    %v157 = vunpack.c.l.b16 %v68
    %v158 = vunpack.c.l.b16 %v69
    %v159 = vunpack.c.h.b16 %v69
    %v160 = vunpack.c.l.b16 %v70
    %v161 = vunpack.c.l.b16 %v71
    %v162 = vunpack.c.h.b16 %v71
    %v163 = vunpack.c.l.b16 %v72
    %v164 = vunpack.c.l.b16 %v73
    %v165 = vunpack.c.h.b16 %v73
    %v166 = vunpack.c.l.b16 %v74
    %v167 = vunpack.c.l.b16 %v75
    %v168 = vunpack.c.h.b16 %v75
    %v169 = vunpack.c.l.b16 %v76
    %v170 = vunpack.c.l.b16 %v77
    %v171 = vunpack.c.h.b16 %v77
    %v172 = vunpack.c.l.b16 %v78
    %v173 = vunpack.c.l.b16 %v79
    %v174 = vunpack.c.h.b16 %v79
    %v175 = vunpack.c.l.b16 %v80
    %v176 = vunpack.c.l.b16 %v81
    %v177 = vunpack.c.h.b16 %v81
    %v178 = vunpack.c.l.b16 %v82
    %v179 = vunpack.c.l.b16 %v83
    %v180 = vunpack.c.h.b16 %v83
    %v181 = vunpack.c.l.b16 %v84
    %v182 = vpack.c.b16 %v137, %v134
    %v183 = vpack.c.b16 %v138, %v135
    %v184 = vpack.c.b16 %v139, %v136
    %v185 = vpack.c.b16 %v143, %v140
    %v186 = vpack.c.b16 %v144, %v141
    %v187 = vpack.c.b16 %v145, %v142
    %v188 = vpack.c.b16 %v149, %v146
    %v189 = vpack.c.b16 %v150, %v147
    %v190 = vpack.c.b16 %v151, %v148
    %v191 = vpack.c.b16 %v155, %v152
    %v192 = vpack.c.b16 %v156, %v153
    %v193 = vpack.c.b16 %v157, %v154
    %v194 = vpack.c.b16 %v161, %v158
    %v195 = vpack.c.b16 %v162, %v159
    %v196 = vpack.c.b16 %v163, %v160
    %v197 = vpack.c.b16 %v167, %v164
    %v198 = vpack.c.b16 %v168, %v165
    %v199 = vpack.c.b16 %v169, %v166
    %v200 = vpack.c.b16 %v173, %v170
    %v201 = vpack.c.b16 %v174, %v171
    %v202 = vpack.c.b16 %v175, %v172
    %v203 = vpack.c.b16 %v179, %v176
    %v204 = vpack.c.b16 %v180, %v177
    %v205 = vpack.c.b16 %v181, %v178
    %230 = vmatprep.subr.bf16.mxu0 %v204
    %231 = vmatpush1.bf16.msra.mxu0 %v203
    %232 = vmatprep.subr.bf16.mxu0 %v201
    %233 = vmatpush1.bf16.msra.mxu0 %v200
    %234 = vmatprep.subr.bf16.mxu0 %v198
    %235 = vmatpush1.bf16.msra.mxu0 %v197
    %236 = vmatprep.subr.bf16.mxu0 %v195
    %237 = vmatpush1.bf16.msra.mxu0 %v194
    %238 = vmatprep.subr.bf16.mxu0 %v192
    %239 = vmatpush1.bf16.msra.mxu0 %v191
    %240 = vmatprep.subr.bf16.mxu0 %v189
    %241 = vmatpush1.bf16.msra.mxu0 %v188
    %242 = vmatprep.subr.bf16.mxu0 %v186
    %243 = vmatpush1.bf16.msra.mxu0 %v185
    %244 = vmatprep.subr.bf16.mxu0 %v183
    %245 = vmatpush1.bf16.msra.mxu0 %v182
    %246 = vmatprep.subr.bf16.mxu0 0
    %247 = vmatpush2.bf16.msra.mxu0 0
    %248 = vmatprep.subr.bf16.mxu0 0
    %249 = vmatpush2.bf16.msra.mxu0 0
    %250 = vmatprep.subr.bf16.mxu0 0
    %251 = vmatpush2.bf16.msra.mxu0 0
    %252 = vmatprep.subr.bf16.mxu0 0
    %253 = vmatpush2.bf16.msra.mxu0 0
    %254 = vmatprep.subr.bf16.mxu0 0
    %255 = vmatpush2.bf16.msra.mxu0 0
    %256 = vmatprep.subr.bf16.mxu0 0
    %257 = vmatpush2.bf16.msra.mxu0 0
    %258 = vmatprep.subr.bf16.mxu0 0
    %259 = vmatpush2.bf16.msra.mxu0 0
    %260 = vmatprep.subr.bf16.mxu0 0
    %261 = vmatpush2.bf16.msra.mxu0 0
    %262 = vmatprep.mubr.bf16.mxu0 0
    %263 = vmatmul.mubr.bf16.gmra.mxu0 %v52
    %v264 = vpop.f32.mrf.mxu0
    %v265 = vadd.f32 %v90, %v264
    %v266 = vpop.f32.mrf.mxu0
    %v267 = vadd.f32 %v94, %v266
    %v268 = vpop.f32.mrf.mxu0
    %v269 = vpop.f32.mrf.mxu0
    %270 = vdwg.mxu0
    %271 = vmatprep.subr.bf16.mxu0 0
    %272 = vmatpush1.bf16.msra.mxu0 %v205
    %273 = vmatprep.subr.bf16.mxu0 0
    %274 = vmatpush1.bf16.msra.mxu0 %v202
    %275 = vmatprep.subr.bf16.mxu0 0
    %276 = vmatpush1.bf16.msra.mxu0 %v199
    %277 = vmatprep.subr.bf16.mxu0 0
    %278 = vmatpush1.bf16.msra.mxu0 %v196
    %279 = vmatprep.subr.bf16.mxu0 0
    %280 = vmatpush1.bf16.msra.mxu0 %v193
    %281 = vmatprep.subr.bf16.mxu0 0
    %282 = vmatpush1.bf16.msra.mxu0 %v190
    %283 = vmatprep.subr.bf16.mxu0 0
    %284 = vmatpush1.bf16.msra.mxu0 %v187
    %285 = vmatprep.subr.bf16.mxu0 0
    %286 = vmatpush1.bf16.msra.mxu0 %v184
    %287 = vmatprep.subr.bf16.mxu0 0
    %288 = vmatpush2.bf16.msra.mxu0 0
    %289 = vmatprep.subr.bf16.mxu0 0
    %290 = vmatpush2.bf16.msra.mxu0 0
    %291 = vmatprep.subr.bf16.mxu0 0
    %292 = vmatpush2.bf16.msra.mxu0 0
    %293 = vmatprep.subr.bf16.mxu0 0
    %294 = vmatpush2.bf16.msra.mxu0 0
    %295 = vmatprep.subr.bf16.mxu0 0
    %296 = vmatpush2.bf16.msra.mxu0 0
    %297 = vmatprep.subr.bf16.mxu0 0
    %298 = vmatpush2.bf16.msra.mxu0 0
    %299 = vmatprep.subr.bf16.mxu0 0
    %300 = vmatpush2.bf16.msra.mxu0 0
    %301 = vmatprep.subr.bf16.mxu0 0
    %302 = vmatpush2.bf16.msra.mxu0 0
    %303 = vmatprep.mubr.bf16.mxu0 0
    %304 = vmatmul.mubr.bf16.gmra.mxu0 %v52
    %v305 = vpop.f32.mrf.mxu0
    %v306 = vadd.f32 %v98, %v305
    %v307 = vpop.f32.mrf.mxu0
    %v308 = vpop.f32.mrf.mxu0
    %v309 = vpop.f32.mrf.mxu0
    %310 = vdwg.mxu0
    %v311 = vld [vmem:[#allocation4] sm:$0xff]
    %v312 = vld [vmem:[#allocation4 + $0x8] sm:$0xf]
    %v313 = vld [vmem:[#allocation4 + $0xc] sm:$0xff]
    %v314 = vld [vmem:[#allocation4 + $0x14] sm:$0xf]
    %v315 = vld [vmem:[#allocation4 + $0x18] sm:$0xff]
    %v316 = vld [vmem:[#allocation4 + $0x20] sm:$0xf]
    %v317 = vld [vmem:[#allocation4 + $0x24] sm:$0xff]
    %v318 = vld [vmem:[#allocation4 + $0x2c] sm:$0xf]
    %v319 = vld [vmem:[#allocation4 + $0x30] sm:$0xff]
    %v320 = vld [vmem:[#allocation4 + $0x38] sm:$0xf]
    %v321 = vld [vmem:[#allocation4 + $0x3c] sm:$0xff]
    %v322 = vld [vmem:[#allocation4 + $0x44] sm:$0xf]
    %v323 = vld [vmem:[#allocation4 + $0x48] sm:$0xff]
    %v324 = vld [vmem:[#allocation4 + $0x50] sm:$0xf]
    %v325 = vld [vmem:[#allocation4 + $0x54] sm:$0xff]
    %v326 = vld [vmem:[#allocation4 + $0x5c] sm:$0xf]
    %v327 = vld [vmem:[#allocation4 + $0x60] sm:$0xff]
    %v328 = vld [vmem:[#allocation4 + $0x68] sm:$0xf]
    %v329 = vld [vmem:[#allocation4 + $0x6c] sm:$0xff]
    %v330 = vld [vmem:[#allocation4 + $0x74] sm:$0xf]
    %v331 = vld [vmem:[#allocation4 + $0x78] sm:$0xff]
    %v332 = vld [vmem:[#allocation4 + $0x80] sm:$0xf]
    %v333 = vld [vmem:[#allocation4 + $0x84] sm:$0xff]
    %v334 = vld [vmem:[#allocation4 + $0x8c] sm:$0xf]
    %v335 = vld [vmem:[#allocation4 + $0x90] sm:$0xff]
    %v336 = vld [vmem:[#allocation4 + $0x98] sm:$0xf]
    %v337 = vld [vmem:[#allocation4 + $0x9c] sm:$0xff]
    %v338 = vld [vmem:[#allocation4 + $0xa4] sm:$0xf]
    %v339 = vld [vmem:[#allocation4 + $0xa8] sm:$0xff]
    %v340 = vld [vmem:[#allocation4 + $0xb0] sm:$0xf]
    %v341 = vld [vmem:[#allocation4 + $0xb4] sm:$0xff]
    %v342 = vld [vmem:[#allocation4 + $0xbc] sm:$0xf]
    %v343 = vld [vmem:[%s4] sm:$0x1]
    %v344 = vld [vmem:[%s5] sm:$0x1]
    %v345 = vpack.c.bf16 %v344, %v344
    %v378 = vunpack.c.l.b16 %v311
    %v379 = vunpack.c.h.b16 %v311
    %v380 = vunpack.c.l.b16 %v312
    %v381 = vunpack.c.l.b16 %v313
    %v382 = vunpack.c.h.b16 %v313
    %v383 = vunpack.c.l.b16 %v314
    %v384 = vunpack.c.l.b16 %v315
    %v385 = vunpack.c.h.b16 %v315
    %v386 = vunpack.c.l.b16 %v316
    %v387 = vunpack.c.l.b16 %v317
    %v388 = vunpack.c.h.b16 %v317
    %v389 = vunpack.c.l.b16 %v318
    %v390 = vunpack.c.l.b16 %v319
    %v391 = vunpack.c.h.b16 %v319
    %v392 = vunpack.c.l.b16 %v320
    %v393 = vunpack.c.l.b16 %v321
    %v394 = vunpack.c.h.b16 %v321
    %v395 = vunpack.c.l.b16 %v322
    %v396 = vunpack.c.l.b16 %v323
    %v397 = vunpack.c.h.b16 %v323
    %v398 = vunpack.c.l.b16 %v324
    %v399 = vunpack.c.l.b16 %v325
    %v400 = vunpack.c.h.b16 %v325
    %v401 = vunpack.c.l.b16 %v326
    %v402 = vunpack.c.l.b16 %v327
    %v403 = vunpack.c.h.b16 %v327
    %v404 = vunpack.c.l.b16 %v328
    %v405 = vunpack.c.l.b16 %v329
    %v406 = vunpack.c.h.b16 %v329
    %v407 = vunpack.c.l.b16 %v330
    %v408 = vunpack.c.l.b16 %v331
    %v409 = vunpack.c.h.b16 %v331
    %v410 = vunpack.c.l.b16 %v332
    %v411 = vunpack.c.l.b16 %v333
    %v412 = vunpack.c.h.b16 %v333
    %v413 = vunpack.c.l.b16 %v334
    %v414 = vunpack.c.l.b16 %v335
    %v415 = vunpack.c.h.b16 %v335
    %v416 = vunpack.c.l.b16 %v336
    %v417 = vunpack.c.l.b16 %v337
    %v418 = vunpack.c.h.b16 %v337
    %v419 = vunpack.c.l.b16 %v338
    %v420 = vunpack.c.l.b16 %v339
    %v421 = vunpack.c.h.b16 %v339
    %v422 = vunpack.c.l.b16 %v340
    %v423 = vunpack.c.l.b16 %v341
    %v424 = vunpack.c.h.b16 %v341
    %v425 = vunpack.c.l.b16 %v342
    %v426 = vpack.c.b16 %v381, %v378
    %v427 = vpack.c.b16 %v382, %v379
    %v428 = vpack.c.b16 %v383, %v380
    %v429 = vpack.c.b16 %v387, %v384
    %v430 = vpack.c.b16 %v388, %v385
    %v431 = vpack.c.b16 %v389, %v386
    %v432 = vpack.c.b16 %v393, %v390
    %v433 = vpack.c.b16 %v394, %v391
    %v434 = vpack.c.b16 %v395, %v392
    %v435 = vpack.c.b16 %v399, %v396
    %v436 = vpack.c.b16 %v400, %v397
    %v437 = vpack.c.b16 %v401, %v398
    %v438 = vpack.c.b16 %v405, %v402
    %v439 = vpack.c.b16 %v406, %v403
    %v440 = vpack.c.b16 %v407, %v404
    %v441 = vpack.c.b16 %v411, %v408
    %v442 = vpack.c.b16 %v412, %v409
    %v443 = vpack.c.b16 %v413, %v410
    %v444 = vpack.c.b16 %v417, %v414
    %v445 = vpack.c.b16 %v418, %v415
    %v446 = vpack.c.b16 %v419, %v416
    %v447 = vpack.c.b16 %v423, %v420
    %v448 = vpack.c.b16 %v424, %v421
    %v449 = vpack.c.b16 %v425, %v422
    %474 = vmatprep.subr.bf16.mxu0 %v448
    %475 = vmatpush1.bf16.msra.mxu0 %v447
    %476 = vmatprep.subr.bf16.mxu0 %v445
    %477 = vmatpush1.bf16.msra.mxu0 %v444
    %478 = vmatprep.subr.bf16.mxu0 %v442
    %479 = vmatpush1.bf16.msra.mxu0 %v441
    %480 = vmatprep.subr.bf16.mxu0 %v439
    %481 = vmatpush1.bf16.msra.mxu0 %v438
    %482 = vmatprep.subr.bf16.mxu0 %v436
    %483 = vmatpush1.bf16.msra.mxu0 %v435
    %484 = vmatprep.subr.bf16.mxu0 %v433
    %485 = vmatpush1.bf16.msra.mxu0 %v432
    %486 = vmatprep.subr.bf16.mxu0 %v430
    %487 = vmatpush1.bf16.msra.mxu0 %v429
    %488 = vmatprep.subr.bf16.mxu0 %v427
    %489 = vmatpush1.bf16.msra.mxu0 %v426
    %490 = vmatprep.subr.bf16.mxu0 0
    %491 = vmatpush2.bf16.msra.mxu0 0
    %492 = vmatprep.subr.bf16.mxu0 0
    %493 = vmatpush2.bf16.msra.mxu0 0
    %494 = vmatprep.subr.bf16.mxu0 0
    %495 = vmatpush2.bf16.msra.mxu0 0
    %496 = vmatprep.subr.bf16.mxu0 0
    %497 = vmatpush2.bf16.msra.mxu0 0
    %498 = vmatprep.subr.bf16.mxu0 0
    %499 = vmatpush2.bf16.msra.mxu0 0
    %500 = vmatprep.subr.bf16.mxu0 0
    %501 = vmatpush2.bf16.msra.mxu0 0
    %502 = vmatprep.subr.bf16.mxu0 0
    %503 = vmatpush2.bf16.msra.mxu0 0
    %504 = vmatprep.subr.bf16.mxu0 0
    %505 = vmatpush2.bf16.msra.mxu0 0
    %506 = vmatprep.mubr.bf16.mxu0 0
    %507 = vmatmul.mubr.bf16.gmra.mxu0 %v345
    %v508 = vpop.f32.mrf.mxu0
    %v509 = vadd.f32 0.0, %v508
    %v510 = vpop.f32.mrf.mxu0
    %v511 = vadd.f32 0.0, %v510
    %v512 = vpop.f32.mrf.mxu0
    %v513 = vpop.f32.mrf.mxu0
    %514 = vdwg.mxu0
    %515 = vmatprep.subr.bf16.mxu0 0
    %516 = vmatpush1.bf16.msra.mxu0 %v449
    %517 = vmatprep.subr.bf16.mxu0 0
    %518 = vmatpush1.bf16.msra.mxu0 %v446
    %519 = vmatprep.subr.bf16.mxu0 0
    %520 = vmatpush1.bf16.msra.mxu0 %v443
    %521 = vmatprep.subr.bf16.mxu0 0
    %522 = vmatpush1.bf16.msra.mxu0 %v440
    %523 = vmatprep.subr.bf16.mxu0 0
    %524 = vmatpush1.bf16.msra.mxu0 %v437
    %525 = vmatprep.subr.bf16.mxu0 0
    %526 = vmatpush1.bf16.msra.mxu0 %v434
    %527 = vmatprep.subr.bf16.mxu0 0
    %528 = vmatpush1.bf16.msra.mxu0 %v431
    %529 = vmatprep.subr.bf16.mxu0 0
    %530 = vmatpush1.bf16.msra.mxu0 %v428
    %531 = vmatprep.subr.bf16.mxu0 0
    %532 = vmatpush2.bf16.msra.mxu0 0
    %533 = vmatprep.subr.bf16.mxu0 0
    %534 = vmatpush2.bf16.msra.mxu0 0
    %535 = vmatprep.subr.bf16.mxu0 0
    %536 = vmatpush2.bf16.msra.mxu0 0
    %537 = vmatprep.subr.bf16.mxu0 0
    %538 = vmatpush2.bf16.msra.mxu0 0
    %539 = vmatprep.subr.bf16.mxu0 0
    %540 = vmatpush2.bf16.msra.mxu0 0
    %541 = vmatprep.subr.bf16.mxu0 0
    %542 = vmatpush2.bf16.msra.mxu0 0
    %543 = vmatprep.subr.bf16.mxu0 0
    %544 = vmatpush2.bf16.msra.mxu0 0
    %545 = vmatprep.subr.bf16.mxu0 0
    %546 = vmatpush2.bf16.msra.mxu0 0
    %547 = vmatprep.mubr.bf16.mxu0 0
    %548 = vmatmul.mubr.bf16.gmra.mxu0 %v345
    %v549 = vpop.f32.mrf.mxu0
    %v550 = vadd.f32 0.0, %v549
    %v551 = vpop.f32.mrf.mxu0
    %v552 = vpop.f32.mrf.mxu0
    %v553 = vpop.f32.mrf.mxu0
    %554 = vdwg.mxu0
    %v555 = vadd.f32 %v265, %v509
    %v556 = vxor.u32 %v555, 2147483648
    %v557 = vmul.f32 %v556, 1.442695
    %v558 = vpow.pop %v557
    %v559 = vadd.f32 %v558, 1.0
    %v560 = vrcp.pop %v559
    %v561 = vmul.f32 1.0, %v560
    %v562 = vadd.f32 %v267, %v511
    %v563 = vxor.u32 %v562, 2147483648
    %v564 = vmul.f32 %v563, 1.442695
    %v565 = vpow.pop %v564
    %v566 = vadd.f32 %v565, 1.0
    %v567 = vrcp.pop %v566
    %v568 = vmul.f32 1.0, %v567
    %v569 = vadd.f32 %v550, %v343
    %v570 = vmul.f32 %v561, %v569
    %v571 = vadd.f32 %v306, %v570
    %v572 = vtanh.pop %v571
    %v573 = vsub.f32 %v344, %v572
    %v574 = vmul.f32 %v568, %v573
    %v575 = vadd.f32 %v572, %v574
    %v576 = vpack.c.bf16 %v575, %v575
    %577 = vmatprep.subr.bf16.mxu0 %v448
    %578 = vmatpush1.bf16.msra.mxu0 %v447
    %579 = vmatprep.subr.bf16.mxu0 %v445
    %580 = vmatpush1.bf16.msra.mxu0 %v444
    %581 = vmatprep.subr.bf16.mxu0 %v442
    %582 = vmatpush1.bf16.msra.mxu0 %v441
    %583 = vmatprep.subr.bf16.mxu0 %v439
    %584 = vmatpush1.bf16.msra.mxu0 %v438
    %585 = vmatprep.subr.bf16.mxu0 %v436
    %586 = vmatpush1.bf16.msra.mxu0 %v435
    %587 = vmatprep.subr.bf16.mxu0 %v433
    %588 = vmatpush1.bf16.msra.mxu0 %v432
    %589 = vmatprep.subr.bf16.mxu0 %v430
    %590 = vmatpush1.bf16.msra.mxu0 %v429
    %591 = vmatprep.subr.bf16.mxu0 %v427
    %592 = vmatpush1.bf16.msra.mxu0 %v426
    %593 = vmatprep.subr.bf16.mxu0 0
    %594 = vmatpush2.bf16.msra.mxu0 0
    %595 = vmatprep.subr.bf16.mxu0 0
    %596 = vmatpush2.bf16.msra.mxu0 0
    %597 = vmatprep.subr.bf16.mxu0 0
    %598 = vmatpush2.bf16.msra.mxu0 0
    %599 = vmatprep.subr.bf16.mxu0 0
    %600 = vmatpush2.bf16.msra.mxu0 0
    %601 = vmatprep.subr.bf16.mxu0 0
    %602 = vmatpush2.bf16.msra.mxu0 0
    %603 = vmatprep.subr.bf16.mxu0 0
    %604 = vmatpush2.bf16.msra.mxu0 0
    %605 = vmatprep.subr.bf16.mxu0 0
    %606 = vmatpush2.bf16.msra.mxu0 0
    %607 = vmatprep.subr.bf16.mxu0 0
    %608 = vmatpush2.bf16.msra.mxu0 0
    %609 = vmatprep.mubr.bf16.mxu0 0
    %610 = vmatmul.mubr.bf16.gmra.mxu0 %v576
    %v611 = vpop.f32.mrf.mxu0
    %v612 = vadd.f32 0.0, %v611
    %v613 = vpop.f32.mrf.mxu0
    %v614 = vadd.f32 0.0, %v613
    %v615 = vpop.f32.mrf.mxu0
    %v616 = vpop.f32.mrf.mxu0
    %617 = vdwg.mxu0
    %618 = vmatprep.subr.bf16.mxu0 0
    %619 = vmatpush1.bf16.msra.mxu0 %v449
    %620 = vmatprep.subr.bf16.mxu0 0
    %621 = vmatpush1.bf16.msra.mxu0 %v446
    %622 = vmatprep.subr.bf16.mxu0 0
    %623 = vmatpush1.bf16.msra.mxu0 %v443
    %624 = vmatprep.subr.bf16.mxu0 0
    %625 = vmatpush1.bf16.msra.mxu0 %v440
    %626 = vmatprep.subr.bf16.mxu0 0
    %627 = vmatpush1.bf16.msra.mxu0 %v437
    %628 = vmatprep.subr.bf16.mxu0 0
    %629 = vmatpush1.bf16.msra.mxu0 %v434
    %630 = vmatprep.subr.bf16.mxu0 0
    %631 = vmatpush1.bf16.msra.mxu0 %v431
    %632 = vmatprep.subr.bf16.mxu0 0
    %633 = vmatpush1.bf16.msra.mxu0 %v428
    %634 = vmatprep.subr.bf16.mxu0 0
    %635 = vmatpush2.bf16.msra.mxu0 0
    %636 = vmatprep.subr.bf16.mxu0 0
    %637 = vmatpush2.bf16.msra.mxu0 0
    %638 = vmatprep.subr.bf16.mxu0 0
    %639 = vmatpush2.bf16.msra.mxu0 0
    %640 = vmatprep.subr.bf16.mxu0 0
    %641 = vmatpush2.bf16.msra.mxu0 0
    %642 = vmatprep.subr.bf16.mxu0 0
    %643 = vmatpush2.bf16.msra.mxu0 0
    %644 = vmatprep.subr.bf16.mxu0 0
    %645 = vmatpush2.bf16.msra.mxu0 0
    %646 = vmatprep.subr.bf16.mxu0 0
    %647 = vmatpush2.bf16.msra.mxu0 0
    %648 = vmatprep.subr.bf16.mxu0 0
    %649 = vmatpush2.bf16.msra.mxu0 0
    %650 = vmatprep.mubr.bf16.mxu0 0
    %651 = vmatmul.mubr.bf16.gmra.mxu0 %v576
    %v652 = vpop.f32.mrf.mxu0
    %v653 = vadd.f32 0.0, %v652
    %v654 = vpop.f32.mrf.mxu0
    %v655 = vpop.f32.mrf.mxu0
    %v656 = vpop.f32.mrf.mxu0
    %657 = vdwg.mxu0
    %v659 = vrot.slane %v612, 7
    %v661 = vadd.f32 %v265, %v659
    %v662 = vxor.u32 %v661, 2147483648
    %v663 = vmul.f32 %v662, 1.442695
    %v664 = vpow.pop %v663
    %v665 = vadd.f32 %v664, 1.0
    %v666 = vrcp.pop %v665
    %v667 = vmul.f32 1.0, %v666
    %v669 = vrot.slane %v614, 7
    %v671 = vadd.f32 %v267, %v669
    %v672 = vxor.u32 %v671, 2147483648
    %v673 = vmul.f32 %v672, 1.442695
    %v674 = vpow.pop %v673
    %v675 = vadd.f32 %v674, 1.0
    %v676 = vrcp.pop %v675
    %v677 = vmul.f32 1.0, %v676
    %v678 = vadd.f32 %v653, %v343
    %v680 = vrot.slane %v678, 7
    %v682 = vmul.f32 %v667, %v680
    %v683 = vadd.f32 %v306, %v682
    %v684 = vtanh.pop %v683
    %v686 = vrot.slane %v684, 1
    %v688 = vsub.f32 %v575, %v686
    %v690 = vrot.slane %v688, 7
    %v692 = vmul.f32 %v677, %v690
    %v693 = vadd.f32 %v684, %v692
    %v694 = vpack.c.bf16 %v693, %v693
    %v696 = vshrl.u32 %v694, 16
    %699 = vmatprep.subr.bf16.mxu0 %v448
    %700 = vmatpush1.bf16.msra.mxu0 %v447
    %701 = vmatprep.subr.bf16.mxu0 %v445
    %702 = vmatpush1.bf16.msra.mxu0 %v444
    %703 = vmatprep.subr.bf16.mxu0 %v442
    %704 = vmatpush1.bf16.msra.mxu0 %v441
    %705 = vmatprep.subr.bf16.mxu0 %v439
    %706 = vmatpush1.bf16.msra.mxu0 %v438
    %707 = vmatprep.subr.bf16.mxu0 %v436
    %708 = vmatpush1.bf16.msra.mxu0 %v435
    %709 = vmatprep.subr.bf16.mxu0 %v433
    %710 = vmatpush1.bf16.msra.mxu0 %v432
    %711 = vmatprep.subr.bf16.mxu0 %v430
    %712 = vmatpush1.bf16.msra.mxu0 %v429
    %713 = vmatprep.subr.bf16.mxu0 %v427
    %714 = vmatpush1.bf16.msra.mxu0 %v426
    %715 = vmatprep.subr.bf16.mxu0 0
    %716 = vmatpush2.bf16.msra.mxu0 0
    %717 = vmatprep.subr.bf16.mxu0 0
    %718 = vmatpush2.bf16.msra.mxu0 0
    %719 = vmatprep.subr.bf16.mxu0 0
    %720 = vmatpush2.bf16.msra.mxu0 0
    %721 = vmatprep.subr.bf16.mxu0 0
    %722 = vmatpush2.bf16.msra.mxu0 0
    %723 = vmatprep.subr.bf16.mxu0 0
    %724 = vmatpush2.bf16.msra.mxu0 0
    %725 = vmatprep.subr.bf16.mxu0 0
    %726 = vmatpush2.bf16.msra.mxu0 0
    %727 = vmatprep.subr.bf16.mxu0 0
    %728 = vmatpush2.bf16.msra.mxu0 0
    %729 = vmatprep.subr.bf16.mxu0 0
    %730 = vmatpush2.bf16.msra.mxu0 0
    %731 = vmatprep.mubr.bf16.mxu0 0
    %732 = vmatmul.mubr.bf16.gmra.mxu0 %v696
    %v733 = vpop.f32.mrf.mxu0
    %v734 = vadd.f32 0.0, %v733
    %v735 = vpop.f32.mrf.mxu0
    %v736 = vadd.f32 0.0, %v735
    %v737 = vpop.f32.mrf.mxu0
    %v738 = vpop.f32.mrf.mxu0
    %739 = vdwg.mxu0
    %740 = vmatprep.subr.bf16.mxu0 0
    %741 = vmatpush1.bf16.msra.mxu0 %v449
    %742 = vmatprep.subr.bf16.mxu0 0
    %743 = vmatpush1.bf16.msra.mxu0 %v446
    %744 = vmatprep.subr.bf16.mxu0 0
    %745 = vmatpush1.bf16.msra.mxu0 %v443
    %746 = vmatprep.subr.bf16.mxu0 0
    %747 = vmatpush1.bf16.msra.mxu0 %v440
    %748 = vmatprep.subr.bf16.mxu0 0
    %749 = vmatpush1.bf16.msra.mxu0 %v437
    %750 = vmatprep.subr.bf16.mxu0 0
    %751 = vmatpush1.bf16.msra.mxu0 %v434
    %752 = vmatprep.subr.bf16.mxu0 0
    %753 = vmatpush1.bf16.msra.mxu0 %v431
    %754 = vmatprep.subr.bf16.mxu0 0
    %755 = vmatpush1.bf16.msra.mxu0 %v428
    %756 = vmatprep.subr.bf16.mxu0 0
    %757 = vmatpush2.bf16.msra.mxu0 0
    %758 = vmatprep.subr.bf16.mxu0 0
    %759 = vmatpush2.bf16.msra.mxu0 0
    %760 = vmatprep.subr.bf16.mxu0 0
    %761 = vmatpush2.bf16.msra.mxu0 0
    %762 = vmatprep.subr.bf16.mxu0 0
    %763 = vmatpush2.bf16.msra.mxu0 0
    %764 = vmatprep.subr.bf16.mxu0 0
    %765 = vmatpush2.bf16.msra.mxu0 0
    %766 = vmatprep.subr.bf16.mxu0 0
    %767 = vmatpush2.bf16.msra.mxu0 0
    %768 = vmatprep.subr.bf16.mxu0 0
    %769 = vmatpush2.bf16.msra.mxu0 0
    %770 = vmatprep.subr.bf16.mxu0 0
    %771 = vmatpush2.bf16.msra.mxu0 0
    %772 = vmatprep.mubr.bf16.mxu0 0
    %773 = vmatmul.mubr.bf16.gmra.mxu0 %v696
    %v774 = vpop.f32.mrf.mxu0
    %v775 = vadd.f32 0.0, %v774
    %v776 = vpop.f32.mrf.mxu0
    %v777 = vpop.f32.mrf.mxu0
    %v778 = vpop.f32.mrf.mxu0
    %779 = vdwg.mxu0
    %v781 = vrot.slane %v734, 6
    %v783 = vadd.f32 %v265, %v781
    %v784 = vxor.u32 %v783, 2147483648
    %v785 = vmul.f32 %v784, 1.442695
    %v786 = vpow.pop %v785
    %v787 = vadd.f32 %v786, 1.0
    %v788 = vrcp.pop %v787
    %v789 = vmul.f32 1.0, %v788
    %v791 = vrot.slane %v736, 6
    %v793 = vadd.f32 %v267, %v791
    %v794 = vxor.u32 %v793, 2147483648
    %v795 = vmul.f32 %v794, 1.442695
    %v796 = vpow.pop %v795
    %v797 = vadd.f32 %v796, 1.0
    %v798 = vrcp.pop %v797
    %v799 = vmul.f32 1.0, %v798
    %v800 = vadd.f32 %v775, %v343
    %v802 = vrot.slane %v800, 6
    %v804 = vmul.f32 %v789, %v802
    %v805 = vadd.f32 %v306, %v804
    %v806 = vtanh.pop %v805
    %v808 = vrot.slane %v806, 1
    %v810 = vsub.f32 %v693, %v808
    %v812 = vrot.slane %v810, 7
    %v814 = vmul.f32 %v799, %v812
    %v815 = vadd.f32 %v806, %v814
    %v816 = vpack.c.bf16 %v815, %v815
    %v818 = vrot.slane %v816, 1
    %820 = vmatprep.subr.bf16.mxu0 %v448
    %821 = vmatpush1.bf16.msra.mxu0 %v447
    %822 = vmatprep.subr.bf16.mxu0 %v445
    %823 = vmatpush1.bf16.msra.mxu0 %v444
    %824 = vmatprep.subr.bf16.mxu0 %v442
    %825 = vmatpush1.bf16.msra.mxu0 %v441
    %826 = vmatprep.subr.bf16.mxu0 %v439
    %827 = vmatpush1.bf16.msra.mxu0 %v438
    %828 = vmatprep.subr.bf16.mxu0 %v436
    %829 = vmatpush1.bf16.msra.mxu0 %v435
    %830 = vmatprep.subr.bf16.mxu0 %v433
    %831 = vmatpush1.bf16.msra.mxu0 %v432
    %832 = vmatprep.subr.bf16.mxu0 %v430
    %833 = vmatpush1.bf16.msra.mxu0 %v429
    %834 = vmatprep.subr.bf16.mxu0 %v427
    %835 = vmatpush1.bf16.msra.mxu0 %v426
    %836 = vmatprep.subr.bf16.mxu0 0
    %837 = vmatpush2.bf16.msra.mxu0 0
    %838 = vmatprep.subr.bf16.mxu0 0
    %839 = vmatpush2.bf16.msra.mxu0 0
    %840 = vmatprep.subr.bf16.mxu0 0
    %841 = vmatpush2.bf16.msra.mxu0 0
    %842 = vmatprep.subr.bf16.mxu0 0
    %843 = vmatpush2.bf16.msra.mxu0 0
    %844 = vmatprep.subr.bf16.mxu0 0
    %845 = vmatpush2.bf16.msra.mxu0 0
    %846 = vmatprep.subr.bf16.mxu0 0
    %847 = vmatpush2.bf16.msra.mxu0 0
    %848 = vmatprep.subr.bf16.mxu0 0
    %849 = vmatpush2.bf16.msra.mxu0 0
    %850 = vmatprep.subr.bf16.mxu0 0
    %851 = vmatpush2.bf16.msra.mxu0 0
    %852 = vmatprep.mubr.bf16.mxu0 0
    %853 = vmatmul.mubr.bf16.gmra.mxu0 %v818
    %v854 = vpop.f32.mrf.mxu0
    %v855 = vadd.f32 0.0, %v854
    %v856 = vpop.f32.mrf.mxu0
    %v857 = vadd.f32 0.0, %v856
    %v858 = vpop.f32.mrf.mxu0
    %v859 = vpop.f32.mrf.mxu0
    %860 = vdwg.mxu0
    %861 = vmatprep.subr.bf16.mxu0 0
    %862 = vmatpush1.bf16.msra.mxu0 %v449
    %863 = vmatprep.subr.bf16.mxu0 0
    %864 = vmatpush1.bf16.msra.mxu0 %v446
    %865 = vmatprep.subr.bf16.mxu0 0
    %866 = vmatpush1.bf16.msra.mxu0 %v443
    %867 = vmatprep.subr.bf16.mxu0 0
    %868 = vmatpush1.bf16.msra.mxu0 %v440
    %869 = vmatprep.subr.bf16.mxu0 0
    %870 = vmatpush1.bf16.msra.mxu0 %v437
    %871 = vmatprep.subr.bf16.mxu0 0
    %872 = vmatpush1.bf16.msra.mxu0 %v434
    %873 = vmatprep.subr.bf16.mxu0 0
    %874 = vmatpush1.bf16.msra.mxu0 %v431
    %875 = vmatprep.subr.bf16.mxu0 0
    %876 = vmatpush1.bf16.msra.mxu0 %v428
    %877 = vmatprep.subr.bf16.mxu0 0
    %878 = vmatpush2.bf16.msra.mxu0 0
    %879 = vmatprep.subr.bf16.mxu0 0
    %880 = vmatpush2.bf16.msra.mxu0 0
    %881 = vmatprep.subr.bf16.mxu0 0
    %882 = vmatpush2.bf16.msra.mxu0 0
    %883 = vmatprep.subr.bf16.mxu0 0
    %884 = vmatpush2.bf16.msra.mxu0 0
    %885 = vmatprep.subr.bf16.mxu0 0
    %886 = vmatpush2.bf16.msra.mxu0 0
    %887 = vmatprep.subr.bf16.mxu0 0
    %888 = vmatpush2.bf16.msra.mxu0 0
    %889 = vmatprep.subr.bf16.mxu0 0
    %890 = vmatpush2.bf16.msra.mxu0 0
    %891 = vmatprep.subr.bf16.mxu0 0
    %892 = vmatpush2.bf16.msra.mxu0 0
    %893 = vmatprep.mubr.bf16.mxu0 0
    %894 = vmatmul.mubr.bf16.gmra.mxu0 %v818
    %v895 = vpop.f32.mrf.mxu0
    %v896 = vadd.f32 0.0, %v895
    %v897 = vpop.f32.mrf.mxu0
    %v898 = vpop.f32.mrf.mxu0
    %v899 = vpop.f32.mrf.mxu0
    %900 = vdwg.mxu0
    %v902 = vrot.slane %v855, 5
    %v904 = vadd.f32 %v265, %v902
    %v905 = vxor.u32 %v904, 2147483648
    %v906 = vmul.f32 %v905, 1.442695
    %v907 = vpow.pop %v906
    %v908 = vadd.f32 %v907, 1.0
    %v909 = vrcp.pop %v908
    %v910 = vmul.f32 1.0, %v909
    %v912 = vrot.slane %v857, 5
    %v914 = vadd.f32 %v267, %v912
    %v915 = vxor.u32 %v914, 2147483648
    %v916 = vmul.f32 %v915, 1.442695
    %v917 = vpow.pop %v916
    %v918 = vadd.f32 %v917, 1.0
    %v919 = vrcp.pop %v918
    %v920 = vmul.f32 1.0, %v919
    %v921 = vadd.f32 %v896, %v343
    %v923 = vrot.slane %v921, 5
    %v925 = vmul.f32 %v910, %v923
    %v926 = vadd.f32 %v306, %v925
    %v927 = vtanh.pop %v926
    %v929 = vrot.slane %v927, 1
    %v931 = vsub.f32 %v815, %v929
    %v933 = vrot.slane %v931, 7
    %v935 = vmul.f32 %v920, %v933
    %v936 = vadd.f32 %v927, %v935
    %v937 = vpack.c.bf16 %v936, %v936
    %v939 = vshrl.u32 %v937, 16
    %v941 = vrot.slane %v939, 1
    %943 = vmatprep.subr.bf16.mxu0 %v448
    %944 = vmatpush1.bf16.msra.mxu0 %v447
    %945 = vmatprep.subr.bf16.mxu0 %v445
    %946 = vmatpush1.bf16.msra.mxu0 %v444
    %947 = vmatprep.subr.bf16.mxu0 %v442
    %948 = vmatpush1.bf16.msra.mxu0 %v441
    %949 = vmatprep.subr.bf16.mxu0 %v439
    %950 = vmatpush1.bf16.msra.mxu0 %v438
    %951 = vmatprep.subr.bf16.mxu0 %v436
    %952 = vmatpush1.bf16.msra.mxu0 %v435
    %953 = vmatprep.subr.bf16.mxu0 %v433
    %954 = vmatpush1.bf16.msra.mxu0 %v432
    %955 = vmatprep.subr.bf16.mxu0 %v430
    %956 = vmatpush1.bf16.msra.mxu0 %v429
    %957 = vmatprep.subr.bf16.mxu0 %v427
    %958 = vmatpush1.bf16.msra.mxu0 %v426
    %959 = vmatprep.subr.bf16.mxu0 0
    %960 = vmatpush2.bf16.msra.mxu0 0
    %961 = vmatprep.subr.bf16.mxu0 0
    %962 = vmatpush2.bf16.msra.mxu0 0
    %963 = vmatprep.subr.bf16.mxu0 0
    %964 = vmatpush2.bf16.msra.mxu0 0
    %965 = vmatprep.subr.bf16.mxu0 0
    %966 = vmatpush2.bf16.msra.mxu0 0
    %967 = vmatprep.subr.bf16.mxu0 0
    %968 = vmatpush2.bf16.msra.mxu0 0
    %969 = vmatprep.subr.bf16.mxu0 0
    %970 = vmatpush2.bf16.msra.mxu0 0
    %971 = vmatprep.subr.bf16.mxu0 0
    %972 = vmatpush2.bf16.msra.mxu0 0
    %973 = vmatprep.subr.bf16.mxu0 0
    %974 = vmatpush2.bf16.msra.mxu0 0
    %975 = vmatprep.mubr.bf16.mxu0 0
    %976 = vmatmul.mubr.bf16.gmra.mxu0 %v941
    %v977 = vpop.f32.mrf.mxu0
    %v978 = vadd.f32 0.0, %v977
    %v979 = vpop.f32.mrf.mxu0
    %v980 = vadd.f32 0.0, %v979
    %v981 = vpop.f32.mrf.mxu0
    %v982 = vpop.f32.mrf.mxu0
    %983 = vdwg.mxu0
    %984 = vmatprep.subr.bf16.mxu0 0
    %985 = vmatpush1.bf16.msra.mxu0 %v449
    %986 = vmatprep.subr.bf16.mxu0 0
    %987 = vmatpush1.bf16.msra.mxu0 %v446
    %988 = vmatprep.subr.bf16.mxu0 0
    %989 = vmatpush1.bf16.msra.mxu0 %v443
    %990 = vmatprep.subr.bf16.mxu0 0
    %991 = vmatpush1.bf16.msra.mxu0 %v440
    %992 = vmatprep.subr.bf16.mxu0 0
    %993 = vmatpush1.bf16.msra.mxu0 %v437
    %994 = vmatprep.subr.bf16.mxu0 0
    %995 = vmatpush1.bf16.msra.mxu0 %v434
    %996 = vmatprep.subr.bf16.mxu0 0
    %997 = vmatpush1.bf16.msra.mxu0 %v431
    %998 = vmatprep.subr.bf16.mxu0 0
    %999 = vmatpush1.bf16.msra.mxu0 %v428
    %1000 = vmatprep.subr.bf16.mxu0 0
    %1001 = vmatpush2.bf16.msra.mxu0 0
    %1002 = vmatprep.subr.bf16.mxu0 0
    %1003 = vmatpush2.bf16.msra.mxu0 0
    %1004 = vmatprep.subr.bf16.mxu0 0
    %1005 = vmatpush2.bf16.msra.mxu0 0
    %1006 = vmatprep.subr.bf16.mxu0 0
    %1007 = vmatpush2.bf16.msra.mxu0 0
    %1008 = vmatprep.subr.bf16.mxu0 0
    %1009 = vmatpush2.bf16.msra.mxu0 0
    %1010 = vmatprep.subr.bf16.mxu0 0
    %1011 = vmatpush2.bf16.msra.mxu0 0
    %1012 = vmatprep.subr.bf16.mxu0 0
    %1013 = vmatpush2.bf16.msra.mxu0 0
    %1014 = vmatprep.subr.bf16.mxu0 0
    %1015 = vmatpush2.bf16.msra.mxu0 0
    %1016 = vmatprep.mubr.bf16.mxu0 0
    %1017 = vmatmul.mubr.bf16.gmra.mxu0 %v941
    %v1018 = vpop.f32.mrf.mxu0
    %v1019 = vadd.f32 0.0, %v1018
    %v1020 = vpop.f32.mrf.mxu0
    %v1021 = vpop.f32.mrf.mxu0
    %v1022 = vpop.f32.mrf.mxu0
    %1023 = vdwg.mxu0
    %v1025 = vrot.slane %v978, 4
    %v1027 = vadd.f32 %v265, %v1025
    %v1028 = vxor.u32 %v1027, 2147483648
    %v1029 = vmul.f32 %v1028, 1.442695
    %v1030 = vpow.pop %v1029
    %v1031 = vadd.f32 %v1030, 1.0
    %v1032 = vrcp.pop %v1031
    %v1033 = vmul.f32 1.0, %v1032
    %v1035 = vrot.slane %v980, 4
    %v1037 = vadd.f32 %v267, %v1035
    %v1038 = vxor.u32 %v1037, 2147483648
    %v1039 = vmul.f32 %v1038, 1.442695
    %v1040 = vpow.pop %v1039
    %v1041 = vadd.f32 %v1040, 1.0
    %v1042 = vrcp.pop %v1041
    %v1043 = vmul.f32 1.0, %v1042
    %v1044 = vadd.f32 %v1019, %v343
    %v1046 = vrot.slane %v1044, 4
    %v1048 = vmul.f32 %v1033, %v1046
    %v1049 = vadd.f32 %v306, %v1048
    %v1050 = vtanh.pop %v1049
    %v1052 = vrot.slane %v1050, 1
    %v1054 = vsub.f32 %v936, %v1052
    %v1056 = vrot.slane %v1054, 7
    %v1058 = vmul.f32 %v1043, %v1056
    %v1059 = vadd.f32 %v1050, %v1058
    %v1060 = vpack.c.bf16 %v1059, %v1059
    %v1062 = vrot.slane %v1060, 2
    %1064 = vmatprep.subr.bf16.mxu0 %v448
    %1065 = vmatpush1.bf16.msra.mxu0 %v447
    %1066 = vmatprep.subr.bf16.mxu0 %v445
    %1067 = vmatpush1.bf16.msra.mxu0 %v444
    %1068 = vmatprep.subr.bf16.mxu0 %v442
    %1069 = vmatpush1.bf16.msra.mxu0 %v441
    %1070 = vmatprep.subr.bf16.mxu0 %v439
    %1071 = vmatpush1.bf16.msra.mxu0 %v438
    %1072 = vmatprep.subr.bf16.mxu0 %v436
    %1073 = vmatpush1.bf16.msra.mxu0 %v435
    %1074 = vmatprep.subr.bf16.mxu0 %v433
    %1075 = vmatpush1.bf16.msra.mxu0 %v432
    %1076 = vmatprep.subr.bf16.mxu0 %v430
    %1077 = vmatpush1.bf16.msra.mxu0 %v429
    %1078 = vmatprep.subr.bf16.mxu0 %v427
    %1079 = vmatpush1.bf16.msra.mxu0 %v426
    %1080 = vmatprep.subr.bf16.mxu0 0
    %1081 = vmatpush2.bf16.msra.mxu0 0
    %1082 = vmatprep.subr.bf16.mxu0 0
    %1083 = vmatpush2.bf16.msra.mxu0 0
    %1084 = vmatprep.subr.bf16.mxu0 0
    %1085 = vmatpush2.bf16.msra.mxu0 0
    %1086 = vmatprep.subr.bf16.mxu0 0
    %1087 = vmatpush2.bf16.msra.mxu0 0
    %1088 = vmatprep.subr.bf16.mxu0 0
    %1089 = vmatpush2.bf16.msra.mxu0 0
    %1090 = vmatprep.subr.bf16.mxu0 0
    %1091 = vmatpush2.bf16.msra.mxu0 0
    %1092 = vmatprep.subr.bf16.mxu0 0
    %1093 = vmatpush2.bf16.msra.mxu0 0
    %1094 = vmatprep.subr.bf16.mxu0 0
    %1095 = vmatpush2.bf16.msra.mxu0 0
    %1096 = vmatprep.mubr.bf16.mxu0 0
    %1097 = vmatmul.mubr.bf16.gmra.mxu0 %v1062
    %v1098 = vpop.f32.mrf.mxu0
    %v1099 = vadd.f32 0.0, %v1098
    %v1100 = vpop.f32.mrf.mxu0
    %v1101 = vadd.f32 0.0, %v1100
    %v1102 = vpop.f32.mrf.mxu0
    %v1103 = vpop.f32.mrf.mxu0
    %1104 = vdwg.mxu0
    %1105 = vmatprep.subr.bf16.mxu0 0
    %1106 = vmatpush1.bf16.msra.mxu0 %v449
    %1107 = vmatprep.subr.bf16.mxu0 0
    %1108 = vmatpush1.bf16.msra.mxu0 %v446
    %1109 = vmatprep.subr.bf16.mxu0 0
    %1110 = vmatpush1.bf16.msra.mxu0 %v443
    %1111 = vmatprep.subr.bf16.mxu0 0
    %1112 = vmatpush1.bf16.msra.mxu0 %v440
    %1113 = vmatprep.subr.bf16.mxu0 0
    %1114 = vmatpush1.bf16.msra.mxu0 %v437
    %1115 = vmatprep.subr.bf16.mxu0 0
    %1116 = vmatpush1.bf16.msra.mxu0 %v434
    %1117 = vmatprep.subr.bf16.mxu0 0
    %1118 = vmatpush1.bf16.msra.mxu0 %v431
    %1119 = vmatprep.subr.bf16.mxu0 0
    %1120 = vmatpush1.bf16.msra.mxu0 %v428
    %1121 = vmatprep.subr.bf16.mxu0 0
    %1122 = vmatpush2.bf16.msra.mxu0 0
    %1123 = vmatprep.subr.bf16.mxu0 0
    %1124 = vmatpush2.bf16.msra.mxu0 0
    %1125 = vmatprep.subr.bf16.mxu0 0
    %1126 = vmatpush2.bf16.msra.mxu0 0
    %1127 = vmatprep.subr.bf16.mxu0 0
    %1128 = vmatpush2.bf16.msra.mxu0 0
    %1129 = vmatprep.subr.bf16.mxu0 0
    %1130 = vmatpush2.bf16.msra.mxu0 0
    %1131 = vmatprep.subr.bf16.mxu0 0
    %1132 = vmatpush2.bf16.msra.mxu0 0
    %1133 = vmatprep.subr.bf16.mxu0 0
    %1134 = vmatpush2.bf16.msra.mxu0 0
    %1135 = vmatprep.subr.bf16.mxu0 0
    %1136 = vmatpush2.bf16.msra.mxu0 0
    %1137 = vmatprep.mubr.bf16.mxu0 0
    %1138 = vmatmul.mubr.bf16.gmra.mxu0 %v1062
    %v1139 = vpop.f32.mrf.mxu0
    %v1140 = vadd.f32 0.0, %v1139
    %v1141 = vpop.f32.mrf.mxu0
    %v1142 = vpop.f32.mrf.mxu0
    %v1143 = vpop.f32.mrf.mxu0
    %1144 = vdwg.mxu0
    %v1146 = vrot.slane %v1099, 3
    %v1148 = vadd.f32 %v265, %v1146
    %v1149 = vxor.u32 %v1148, 2147483648
    %v1150 = vmul.f32 %v1149, 1.442695
    %v1151 = vpow.pop %v1150
    %v1152 = vadd.f32 %v1151, 1.0
    %v1153 = vrcp.pop %v1152
    %v1154 = vmul.f32 1.0, %v1153
    %v1156 = vrot.slane %v1101, 3
    %v1158 = vadd.f32 %v267, %v1156
    %v1159 = vxor.u32 %v1158, 2147483648
    %v1160 = vmul.f32 %v1159, 1.442695
    %v1161 = vpow.pop %v1160
    %v1162 = vadd.f32 %v1161, 1.0
    %v1163 = vrcp.pop %v1162
    %v1164 = vmul.f32 1.0, %v1163
    %v1165 = vadd.f32 %v1140, %v343
    %v1167 = vrot.slane %v1165, 3
    %v1169 = vmul.f32 %v1154, %v1167
    %v1170 = vadd.f32 %v306, %v1169
    %v1171 = vtanh.pop %v1170
    %v1173 = vrot.slane %v1171, 1
    %v1175 = vsub.f32 %v1059, %v1173
    %v1177 = vrot.slane %v1175, 7
    %v1179 = vmul.f32 %v1164, %v1177
    %v1180 = vadd.f32 %v1171, %v1179
    %v1181 = vpack.c.bf16 %v1180, %v1180
    %v1183 = vshrl.u32 %v1181, 16
    %v1185 = vrot.slane %v1183, 2
    %1187 = vmatprep.subr.bf16.mxu0 %v448
    %1188 = vmatpush1.bf16.msra.mxu0 %v447
    %1189 = vmatprep.subr.bf16.mxu0 %v445
    %1190 = vmatpush1.bf16.msra.mxu0 %v444
    %1191 = vmatprep.subr.bf16.mxu0 %v442
    %1192 = vmatpush1.bf16.msra.mxu0 %v441
    %1193 = vmatprep.subr.bf16.mxu0 %v439
    %1194 = vmatpush1.bf16.msra.mxu0 %v438
    %1195 = vmatprep.subr.bf16.mxu0 %v436
    %1196 = vmatpush1.bf16.msra.mxu0 %v435
    %1197 = vmatprep.subr.bf16.mxu0 %v433
    %1198 = vmatpush1.bf16.msra.mxu0 %v432
    %1199 = vmatprep.subr.bf16.mxu0 %v430
    %1200 = vmatpush1.bf16.msra.mxu0 %v429
    %1201 = vmatprep.subr.bf16.mxu0 %v427
    %1202 = vmatpush1.bf16.msra.mxu0 %v426
    %1203 = vmatprep.subr.bf16.mxu0 0
    %1204 = vmatpush2.bf16.msra.mxu0 0
    %1205 = vmatprep.subr.bf16.mxu0 0
    %1206 = vmatpush2.bf16.msra.mxu0 0
    %1207 = vmatprep.subr.bf16.mxu0 0
    %1208 = vmatpush2.bf16.msra.mxu0 0
    %1209 = vmatprep.subr.bf16.mxu0 0
    %1210 = vmatpush2.bf16.msra.mxu0 0
    %1211 = vmatprep.subr.bf16.mxu0 0
    %1212 = vmatpush2.bf16.msra.mxu0 0
    %1213 = vmatprep.subr.bf16.mxu0 0
    %1214 = vmatpush2.bf16.msra.mxu0 0
    %1215 = vmatprep.subr.bf16.mxu0 0
    %1216 = vmatpush2.bf16.msra.mxu0 0
    %1217 = vmatprep.subr.bf16.mxu0 0
    %1218 = vmatpush2.bf16.msra.mxu0 0
    %1219 = vmatprep.mubr.bf16.mxu0 0
    %1220 = vmatmul.mubr.bf16.gmra.mxu0 %v1185
    %v1221 = vpop.f32.mrf.mxu0
    %v1222 = vadd.f32 0.0, %v1221
    %v1223 = vpop.f32.mrf.mxu0
    %v1224 = vadd.f32 0.0, %v1223
    %v1225 = vpop.f32.mrf.mxu0
    %v1226 = vpop.f32.mrf.mxu0
    %1227 = vdwg.mxu0
    %1228 = vmatprep.subr.bf16.mxu0 0
    %1229 = vmatpush1.bf16.msra.mxu0 %v449
    %1230 = vmatprep.subr.bf16.mxu0 0
    %1231 = vmatpush1.bf16.msra.mxu0 %v446
    %1232 = vmatprep.subr.bf16.mxu0 0
    %1233 = vmatpush1.bf16.msra.mxu0 %v443
    %1234 = vmatprep.subr.bf16.mxu0 0
    %1235 = vmatpush1.bf16.msra.mxu0 %v440
    %1236 = vmatprep.subr.bf16.mxu0 0
    %1237 = vmatpush1.bf16.msra.mxu0 %v437
    %1238 = vmatprep.subr.bf16.mxu0 0
    %1239 = vmatpush1.bf16.msra.mxu0 %v434
    %1240 = vmatprep.subr.bf16.mxu0 0
    %1241 = vmatpush1.bf16.msra.mxu0 %v431
    %1242 = vmatprep.subr.bf16.mxu0 0
    %1243 = vmatpush1.bf16.msra.mxu0 %v428
    %1244 = vmatprep.subr.bf16.mxu0 0
    %1245 = vmatpush2.bf16.msra.mxu0 0
    %1246 = vmatprep.subr.bf16.mxu0 0
    %1247 = vmatpush2.bf16.msra.mxu0 0
    %1248 = vmatprep.subr.bf16.mxu0 0
    %1249 = vmatpush2.bf16.msra.mxu0 0
    %1250 = vmatprep.subr.bf16.mxu0 0
    %1251 = vmatpush2.bf16.msra.mxu0 0
    %1252 = vmatprep.subr.bf16.mxu0 0
    %1253 = vmatpush2.bf16.msra.mxu0 0
    %1254 = vmatprep.subr.bf16.mxu0 0
    %1255 = vmatpush2.bf16.msra.mxu0 0
    %1256 = vmatprep.subr.bf16.mxu0 0
    %1257 = vmatpush2.bf16.msra.mxu0 0
    %1258 = vmatprep.subr.bf16.mxu0 0
    %1259 = vmatpush2.bf16.msra.mxu0 0
    %1260 = vmatprep.mubr.bf16.mxu0 0
    %1261 = vmatmul.mubr.bf16.gmra.mxu0 %v1185
    %v1262 = vpop.f32.mrf.mxu0
    %v1263 = vadd.f32 0.0, %v1262
    %v1264 = vpop.f32.mrf.mxu0
    %v1265 = vpop.f32.mrf.mxu0
    %v1266 = vpop.f32.mrf.mxu0
    %1267 = vdwg.mxu0
    %v1269 = vrot.slane %v1222, 2
    %v1271 = vadd.f32 %v265, %v1269
    %v1272 = vxor.u32 %v1271, 2147483648
    %v1273 = vmul.f32 %v1272, 1.442695
    %v1274 = vpow.pop %v1273
    %v1275 = vadd.f32 %v1274, 1.0
    %v1276 = vrcp.pop %v1275
    %v1277 = vmul.f32 1.0, %v1276
    %v1279 = vrot.slane %v1224, 2
    %v1281 = vadd.f32 %v267, %v1279
    %v1282 = vxor.u32 %v1281, 2147483648
    %v1283 = vmul.f32 %v1282, 1.442695
    %v1284 = vpow.pop %v1283
    %v1285 = vadd.f32 %v1284, 1.0
    %v1286 = vrcp.pop %v1285
    %v1287 = vmul.f32 1.0, %v1286
    %v1288 = vadd.f32 %v1263, %v343
    %v1290 = vrot.slane %v1288, 2
    %v1292 = vmul.f32 %v1277, %v1290
    %v1293 = vadd.f32 %v306, %v1292
    %v1294 = vtanh.pop %v1293
    %v1296 = vrot.slane %v1294, 1
    %v1298 = vsub.f32 %v1180, %v1296
    %v1300 = vrot.slane %v1298, 7
    %v1302 = vmul.f32 %v1287, %v1300
    %v1303 = vadd.f32 %v1294, %v1302
    %v1304 = vpack.c.bf16 %v1303, %v1303
    %v1306 = vrot.slane %v1304, 3
    %1308 = vmatprep.subr.bf16.mxu0 %v448
    %1309 = vmatpush1.bf16.msra.mxu0 %v447
    %1310 = vmatprep.subr.bf16.mxu0 %v445
    %1311 = vmatpush1.bf16.msra.mxu0 %v444
    %1312 = vmatprep.subr.bf16.mxu0 %v442
    %1313 = vmatpush1.bf16.msra.mxu0 %v441
    %1314 = vmatprep.subr.bf16.mxu0 %v439
    %1315 = vmatpush1.bf16.msra.mxu0 %v438
    %1316 = vmatprep.subr.bf16.mxu0 %v436
    %1317 = vmatpush1.bf16.msra.mxu0 %v435
    %1318 = vmatprep.subr.bf16.mxu0 %v433
    %1319 = vmatpush1.bf16.msra.mxu0 %v432
    %1320 = vmatprep.subr.bf16.mxu0 %v430
    %1321 = vmatpush1.bf16.msra.mxu0 %v429
    %1322 = vmatprep.subr.bf16.mxu0 %v427
    %1323 = vmatpush1.bf16.msra.mxu0 %v426
    %1324 = vmatprep.subr.bf16.mxu0 0
    %1325 = vmatpush2.bf16.msra.mxu0 0
    %1326 = vmatprep.subr.bf16.mxu0 0
    %1327 = vmatpush2.bf16.msra.mxu0 0
    %1328 = vmatprep.subr.bf16.mxu0 0
    %1329 = vmatpush2.bf16.msra.mxu0 0
    %1330 = vmatprep.subr.bf16.mxu0 0
    %1331 = vmatpush2.bf16.msra.mxu0 0
    %1332 = vmatprep.subr.bf16.mxu0 0
    %1333 = vmatpush2.bf16.msra.mxu0 0
    %1334 = vmatprep.subr.bf16.mxu0 0
    %1335 = vmatpush2.bf16.msra.mxu0 0
    %1336 = vmatprep.subr.bf16.mxu0 0
    %1337 = vmatpush2.bf16.msra.mxu0 0
    %1338 = vmatprep.subr.bf16.mxu0 0
    %1339 = vmatpush2.bf16.msra.mxu0 0
    %1340 = vmatprep.mubr.bf16.mxu0 0
    %1341 = vmatmul.mubr.bf16.gmra.mxu0 %v1306
    %v1342 = vpop.f32.mrf.mxu0
    %v1343 = vadd.f32 0.0, %v1342
    %v1344 = vpop.f32.mrf.mxu0
    %v1345 = vadd.f32 0.0, %v1344
    %v1346 = vpop.f32.mrf.mxu0
    %v1347 = vpop.f32.mrf.mxu0
    %1348 = vdwg.mxu0
    %1349 = vmatprep.subr.bf16.mxu0 0
    %1350 = vmatpush1.bf16.msra.mxu0 %v449
    %1351 = vmatprep.subr.bf16.mxu0 0
    %1352 = vmatpush1.bf16.msra.mxu0 %v446
    %1353 = vmatprep.subr.bf16.mxu0 0
    %1354 = vmatpush1.bf16.msra.mxu0 %v443
    %1355 = vmatprep.subr.bf16.mxu0 0
    %1356 = vmatpush1.bf16.msra.mxu0 %v440
    %1357 = vmatprep.subr.bf16.mxu0 0
    %1358 = vmatpush1.bf16.msra.mxu0 %v437
    %1359 = vmatprep.subr.bf16.mxu0 0
    %1360 = vmatpush1.bf16.msra.mxu0 %v434
    %1361 = vmatprep.subr.bf16.mxu0 0
    %1362 = vmatpush1.bf16.msra.mxu0 %v431
    %1363 = vmatprep.subr.bf16.mxu0 0
    %1364 = vmatpush1.bf16.msra.mxu0 %v428
    %1365 = vmatprep.subr.bf16.mxu0 0
    %1366 = vmatpush2.bf16.msra.mxu0 0
    %1367 = vmatprep.subr.bf16.mxu0 0
    %1368 = vmatpush2.bf16.msra.mxu0 0
    %1369 = vmatprep.subr.bf16.mxu0 0
    %1370 = vmatpush2.bf16.msra.mxu0 0
    %1371 = vmatprep.subr.bf16.mxu0 0
    %1372 = vmatpush2.bf16.msra.mxu0 0
    %1373 = vmatprep.subr.bf16.mxu0 0
    %1374 = vmatpush2.bf16.msra.mxu0 0
    %1375 = vmatprep.subr.bf16.mxu0 0
    %1376 = vmatpush2.bf16.msra.mxu0 0
    %1377 = vmatprep.subr.bf16.mxu0 0
    %1378 = vmatpush2.bf16.msra.mxu0 0
    %1379 = vmatprep.subr.bf16.mxu0 0
    %1380 = vmatpush2.bf16.msra.mxu0 0
    %1381 = vmatprep.mubr.bf16.mxu0 0
    %1382 = vmatmul.mubr.bf16.gmra.mxu0 %v1306
    %v1383 = vpop.f32.mrf.mxu0
    %v1384 = vadd.f32 0.0, %v1383
    %v1385 = vpop.f32.mrf.mxu0
    %v1386 = vpop.f32.mrf.mxu0
    %v1387 = vpop.f32.mrf.mxu0
    %1388 = vdwg.mxu0
    %v1390 = vrot.slane %v1343, 1
    %v1392 = vadd.f32 %v265, %v1390
    %v1393 = vxor.u32 %v1392, 2147483648
    %v1394 = vmul.f32 %v1393, 1.442695
    %v1395 = vpow.pop %v1394
    %v1396 = vadd.f32 %v1395, 1.0
    %v1397 = vrcp.pop %v1396
    %v1398 = vmul.f32 1.0, %v1397
    %v1400 = vrot.slane %v1345, 1
    %v1402 = vadd.f32 %v267, %v1400
    %v1403 = vxor.u32 %v1402, 2147483648
    %v1404 = vmul.f32 %v1403, 1.442695
    %v1405 = vpow.pop %v1404
    %v1406 = vadd.f32 %v1405, 1.0
    %v1407 = vrcp.pop %v1406
    %v1408 = vmul.f32 1.0, %v1407
    %v1409 = vadd.f32 %v1384, %v343
    %v1411 = vrot.slane %v1409, 1
    %v1413 = vmul.f32 %v1398, %v1411
    %v1414 = vadd.f32 %v306, %v1413
    %v1415 = vtanh.pop %v1414
    %v1417 = vrot.slane %v1415, 1
    %v1419 = vsub.f32 %v1303, %v1417
    %v1421 = vrot.slane %v1419, 7
    %v1423 = vmul.f32 %v1408, %v1421
    %v1424 = vadd.f32 %v1415, %v1423
    %vm1425 = vcmask 1040384
    %v1426 = vsel %vm1425, %v575, %v693
    %vm1427 = vcmask 1041408
    %v1428 = vsel %vm1427, %v1426, %v815
    %vm1429 = vcmask 1042432
    %v1430 = vsel %vm1429, %v1428, %v936
    %vm1431 = vcmask 1043456
    %v1432 = vsel %vm1431, %v1430, %v1059
    %vm1433 = vcmask 1044480
    %v1434 = vsel %vm1433, %v1432, %v1180
    %vm1435 = vcmask 1045504
    %v1436 = vsel %vm1435, %v1434, %v1303
    %vm1437 = vcmask 1046528
    %v1438 = vsel %vm1437, %v1436, %v1424
    %1439 = vst [vmem:[%s6] sm:$0xff] %v1438
    // Predicated region
    $region34: #{encoder_forward.1} parent=1 // pred_check
      _
    $region35: #{encoder_forward.1} parent=1 // pred_check_branch
      %1441 = sbr.rel (0) target = $region37
    $region36: #{encoder_forward.1} parent=1 // pred_region
      _
    $region37: #{encoder_forward.1} parent=1 // pred_fallthru
      _
    // Predicated region
    $region38: #{encoder_forward.1} parent=1 // pred_check
      _
    $region39: #{encoder_forward.1} parent=1 // pred_check_branch
      %1443 = sbr.rel (0) target = $region41
    $region40: #{encoder_forward.1} parent=1 // pred_region
      _
    $region41: #{encoder_forward.1} parent=1 // pred_fallthru
      _
    %1444 = vsyncpa [#allocation3], 1
    %1445 = vsyncpa [#allocation5], 1

</llo_original>
